<compile_context>
chip_gen: v6e
topology: v6e:2x2x1
jax: 0.10.0
libtpu: 0.0.40
codegen_flags: <defaults>
</compile_context>

<pallas_src>
import jax
import jax.numpy as jnp
from jax.experimental import pallas as pl
from jax.experimental.pallas import tpu as pltpu


def _make_gat2_kernel(heads: int, c_out: int):
    """Fused kernel: GATConv(H heads) -> ReLU -> concat -> GATConv(1 head)."""
    H, C = heads, c_out
    HC = H * C
    OFF_RES = HC            # residual block start in the layer-1 fused result
    OFF_EL = 2 * HC         # per-head source logits
    OFF_ER = 2 * HC + H     # per-head destination logits

    def kernel(x_ref, adjb_ref, wcat1_ref, bias1_ref, wcat2_ref, bias2_ref,
               o_ref, acat_ref, bd_ref):
        N = x_ref.shape[0]
        x = x_ref[...]                      # (N, Cin) f32
        adj_bias = adjb_ref[...]            # (N, N) f32: 0 where edge u->v, -1e30 otherwise

        def edge_softmax(scores):
            # leaky_relu(0.2) + additive edge mask; masked exp terms underflow
            # to exactly 0 and the self-loop guarantees denom >= 1, so no
            # where-on-exp / max(denom, eps) is needed (pure VALU savings).
            s = jnp.where(scores >= 0.0, scores, 0.2 * scores) + adj_bias
            m = jnp.max(s, axis=-1, keepdims=True)
            p = jnp.exp(s - m)
            denom = jnp.sum(p, axis=-1, keepdims=True)
            return p * pl.reciprocal(denom, approx=True)   # EUP reciprocal

        # ---------------- layer 1: 8-head GATConv ----------------
        # One lane-dense MXU matmul yields ft (HC), residual (HC) and the
        # per-head attention logits el/er (H each) in one slab.
        z1 = jnp.dot(x, wcat1_ref[...], preferred_element_type=jnp.float32)   # (N, 2HC+2H)
        ft1_bf = z1[:, :HC].astype(jnp.bfloat16)                              # (N, HC)
        el_t = jnp.transpose(z1[:, OFF_EL:OFF_EL + H])                        # (H, N), ONE transpose
        er_all = z1[:, OFF_ER:OFF_ER + H]                                     # (N, H)
        col = jax.lax.broadcasted_iota(jnp.int32, (N, HC), 1)                 # lane ids (hoisted)

        # Per-head edge softmax; alpha_cat and the block-diagonal ft are
        # accumulated straight into bf16 VMEM scratch (no live parts list).
        for h in range(H):                                                    # static unroll, H = 8
            alpha_h = edge_softmax(er_all[:, h:h + 1] + el_t[h:h + 1, :])     # (N, N)
            acat_ref[:, h * N:(h + 1) * N] = alpha_h.astype(jnp.bfloat16)
            keep = (col >= h * C) & (col < (h + 1) * C)                       # head-h lanes only
            bd_ref[h * N:(h + 1) * N, :] = jnp.where(keep, ft1_bf, 0.0)

        # Single block-diagonal MXU matmul == all-head aggregation + head
        # concat, produced lane-dense in one shot (bf16 in, f32 accumulate).
        rst1 = jnp.dot(acat_ref[...], bd_ref[...],
                       preferred_element_type=jnp.float32)                    # (N, HC)
        # residual + bias + ReLU (unit_GAT2 applies relu between the two layers)
        h1 = jnp.maximum(rst1 + z1[:, OFF_RES:OFF_RES + HC] + bias1_ref[...], 0.0)

        # ---------------- layer 2: 1-head GATConv ----------------
        # wcat2 layout (HC, 256): lanes [0,C)=W2^T, lane C = a_l proj, lane C+1
        # = a_r proj, lanes [128,128+C) = W_res2^T, rest zero -> vreg-aligned
        # slices and a lane-dense output store.
        z2 = jnp.dot(h1, wcat2_ref[...], preferred_element_type=jnp.float32)  # (N, 256)
        ft2 = z2[:, :128]                            # lanes [0,C) = ft2 (rest zero / logits)
        res2 = z2[:, 128:]                           # lanes [0,C) = residual
        el2_row = jnp.transpose(z2[:, C:C + 1])      # (1, N)
        er2_col = z2[:, C + 1:C + 2]                 # (N, 1)

        alpha2 = edge_softmax(er2_col + el2_row)                              # (N, N)
        rst2 = jnp.dot(alpha2.astype(jnp.bfloat16), ft2.astype(jnp.bfloat16),
                       preferred_element_type=jnp.float32)                    # (N, 128)
        # lanes [0,C): rst2 + res2 + bias2 (the answer); lanes [C,128): finite junk
        o_ref[...] = rst2 + res2 + bias2_ref[...]

    return kernel


def _fuse_layer1(w, attn_l, attn_r, w_res):
    """(Cin, 2*H*C + 2*H) = [W^T | W_res^T | a_l projection | a_r projection]."""
    hc, cin = w.shape
    H, C = attn_l.shape[1], attn_l.shape[2]
    w_r = w.reshape(H, C, cin)
    al_proj = jnp.einsum("hci,hc->ih", w_r, attn_l.reshape(H, C))    # (Cin, H)
    ar_proj = jnp.einsum("hci,hc->ih", w_r, attn_r.reshape(H, C))    # (Cin, H)
    return jnp.concatenate([w.T, w_res.T, al_proj, ar_proj], axis=1).astype(jnp.float32)


def _fuse_layer2(w, attn_l, attn_r, w_res):
    """(K, 256): lanes [0,C)=W^T, C=a_l proj, C+1=a_r proj, [128,128+C)=W_res^T."""
    C, K = w.shape
    assert C + 2 <= 128, "out_channels must be <= 126 for the lane-dense layout"
    al = attn_l.reshape(C)
    ar = attn_r.reshape(C)
    wcat = jnp.zeros((K, 256), jnp.float32)
    wcat = wcat.at[:, 0:C].set(w.T)
    wcat = wcat.at[:, C].set(w.T @ al)
    wcat = wcat.at[:, C + 1].set(w.T @ ar)
    wcat = wcat.at[:, 128:128 + C].set(w_res.T)
    return wcat


def prepare_gat2_params(params):
    """Fuse the weights ONCE (hoisted out of the per-call jitted forward)."""
    (w1, attn_l1, attn_r1, w_res1, bias1,
     w2, attn_l2, attn_r2, w_res2, bias2) = params
    H, C = attn_l1.shape[1], attn_l1.shape[2]
    HC = H * C
    wcat1 = _fuse_layer1(w1, attn_l1, attn_r1, w_res1)               # (Cin, 2HC+2H)
    bias1_row = bias1.reshape(1, HC).astype(jnp.float32)
    wcat2 = _fuse_layer2(w2, attn_l2, attn_r2, w_res2)               # (HC, 256)
    bias2_row = jnp.zeros((1, 128), jnp.float32).at[0, :C].set(bias2)
    return wcat1, bias1_row, wcat2, bias2_row


def adjacency_bias(adj):
    """Per-graph precompute: additive edge mask (0 where edge, -1e30 otherwise)."""
    return jnp.where(adj > 0, 0.0, -1e30).astype(jnp.float32)


@jax.jit
def gat2_forward(x, adj_bias, wcat1, bias1_row, wcat2, bias2_row):
    """Fused Pallas forward of GAT2. Returns (N, 1, Cout) like DGL GATConv."""
    N, cin = x.shape
    HC = bias1_row.shape[1]
    H = (wcat1.shape[1] - 2 * HC) // 2
    C = HC // H
    HN = H * N

    vmem = pl.BlockSpec(memory_space=pltpu.MemorySpace.VMEM)
    cost = pl.CostEstimate(
        flops=int(2 * N * cin * wcat1.shape[1]      # fused layer-1 projection
                  + 2 * N * HN * HC                 # block-diagonal aggregation
                  + 2 * N * HC * 256                # fused layer-2 projection
                  + 2 * N * N * 128),               # layer-2 aggregation
        transcendentals=int((H + 1) * (N * N + N)), # exps + approx reciprocals
        bytes_accessed=int(4 * (x.size + adj_bias.size + wcat1.size + bias1_row.size
                                + wcat2.size + bias2_row.size + N * 128)),
    )
    # For large N: add grid=(pl.cdiv(N, TM),) with adj_bias / alpha scratch /
    # output blocked by destination rows, dimension_semantics=("parallel",)
    # (splits rows across the 2 TCs on v7x), TM sized for 64 MiB VMEM on v7x
    # (128 MiB on v5e/v6e), and an int8/bf16 adjacency stream.  Single-shot here
    # since the whole toy problem fits VMEM and per-grid-step overhead dominates.
    out = pl.pallas_call(
        _make_gat2_kernel(H, C),
        out_shape=jax.ShapeDtypeStruct((N, 128), jnp.float32),       # lane-dense slab
        in_specs=[vmem] * 6,
        out_specs=vmem,
        scratch_shapes=[pltpu.VMEM((N, HN), jnp.bfloat16),           # alpha_cat
                        pltpu.VMEM((HN, HC), jnp.bfloat16)],         # block-diag ft
        cost_estimate=cost,
    )(x.astype(jnp.float32), adj_bias, wcat1, bias1_row, wcat2, bias2_row)

    return out[:, :C].reshape(N, 1, C)


# ---------------------------- pure-JAX reference ----------------------------

def _gat_layer_ref(h, adj, w, attn_l, attn_r, w_res, bias):
    N = h.shape[0]
    H, C = attn_l.shape[1], attn_l.shape[2]
    P = jax.lax.Precision.HIGHEST
    ft = jnp.dot(h, w.T, precision=P).reshape(N, H, C)
    el = jnp.sum(ft * attn_l, axis=-1)                   # (N, H)
    er = jnp.sum(ft * attn_r, axis=-1)                   # (N, H)
    s = er[:, :, None] + el.T[None, :, :]                # (N, H, N): e[v,h,u]
    s = jnp.where(s >= 0, s, 0.2 * s)
    mask = (adj > 0)[:, None, :]
    s = jnp.where(mask, s, -1e30)
    m = jnp.max(s, axis=-1, keepdims=True)
    p = jnp.where(mask, jnp.exp(s - m), 0.0)
    alpha = p / jnp.maximum(jnp.sum(p, axis=-1, keepdims=True), 1e-30)
    rst = jnp.einsum("vhu,uhc->vhc", alpha, ft, precision=P)
    res = jnp.dot(h, w_res.T, precision=P).reshape(N, H, C)
    return rst + res + bias.reshape(1, H, C)


def reference_forward(x, adj, params):
    (w1, al1, ar1, wr1, b1, w2, al2, ar2, wr2, b2) = params
    N = x.shape[0]
    y = _gat_layer_ref(x, adj, w1, al1, ar1, wr1, b1)    # (N, 8, C)
    y = jnp.maximum(y, 0.0).reshape(N, -1)               # ReLU + concat heads
    y = _gat_layer_ref(y, adj, w2, al2, ar2, wr2, b2)    # (N, 1, C)
    return y


if __name__ == "__main__":
    N, C_IN, C_OUT, HEADS = 32, 16, 32, 8
    HID = HEADS * C_OUT                                  # 256

    key = jax.random.PRNGKey(0)
    (k_x, k_adj, k_w1, k_al1, k_ar1, k_wr1, k_b1,
     k_w2, k_al2, k_ar2, k_wr2, k_b2) = jax.random.split(key, 12)

    # node features
    x = jax.random.normal(k_x, (N, C_IN), jnp.float32)

    # random directed graph with self-loops (adj[v, u] = 1 iff edge u -> v)
    adj = (jax.random.uniform(k_adj, (N, N)) < 0.2).astype(jnp.float32)
    adj = jnp.maximum(adj, jnp.eye(N, dtype=jnp.float32))   # no zero in-degree

    gain = jnp.sqrt(2.0)

    def init(k, shape, fan_in, fan_out):
        return jax.random.normal(k, shape, jnp.float32) * gain / jnp.sqrt(fan_in + fan_out)

    # layer 1: GATConv(C_IN -> C_OUT, 8 heads, residual)
    w1 = init(k_w1, (HID, C_IN), C_IN, HID)
    attn_l1 = init(k_al1, (1, HEADS, C_OUT), 1, C_OUT)
    attn_r1 = init(k_ar1, (1, HEADS, C_OUT), 1, C_OUT)
    w_res1 = init(k_wr1, (HID, C_IN), C_IN, HID)
    bias1 = 0.1 * jax.random.normal(k_b1, (HID,), jnp.float32)
    # layer 2: GATConv(8*C_OUT -> C_OUT, 1 head, residual)
    w2 = init(k_w2, (C_OUT, HID), HID, C_OUT)
    attn_l2 = init(k_al2, (1, 1, C_OUT), 1, C_OUT)
    attn_r2 = init(k_ar2, (1, 1, C_OUT), 1, C_OUT)
    w_res2 = init(k_wr2, (C_OUT, HID), HID, C_OUT)
    bias2 = 0.1 * jax.random.normal(k_b2, (C_OUT,), jnp.float32)

    params = (w1, attn_l1, attn_r1, w_res1, bias1,
              w2, attn_l2, attn_r2, w_res2, bias2)

    # One-time preprocessing (hoisted out of the jitted forward).
    fused = prepare_gat2_params(params)
    adj_b = adjacency_bias(adj)

    y = gat2_forward(x, adj_b, *fused)
    y = jax.block_until_ready(y)

    y_ref = reference_forward(x, adj, params)
    assert y.shape == (N, 1, C_OUT)
    max_err = jnp.max(jnp.abs(y - y_ref))
    # tolerance covers the bf16 MXU operands on the two O(N^2) aggregation
    # matmuls (f32 accumulate) plus the EUP approx reciprocals; structural bugs
    # would show as O(0.1+) errors.
    assert jnp.allclose(y, y_ref, atol=2e-2, rtol=2e-2), \
        f"mismatch vs reference (max abs err {max_err})"

    print("KERNEL_OK")
</pallas_src>

<mosaic_0001>
module attributes {stable_mosaic.version = 11 : i64} {
  func.func @kernel(%arg0: memref<32x16xf32, #tpu.memory_space<vmem>>, %arg1: memref<32x32xf32, #tpu.memory_space<vmem>>, %arg2: memref<16x528xf32, #tpu.memory_space<vmem>>, %arg3: memref<1x256xf32, #tpu.memory_space<vmem>>, %arg4: memref<256x256xf32, #tpu.memory_space<vmem>>, %arg5: memref<1x128xf32, #tpu.memory_space<vmem>>, %arg6: memref<32x128xf32, #tpu.memory_space<vmem>>, %arg7: memref<32x256xbf16, #tpu.memory_space<vmem>>, %arg8: memref<256x256xbf16, #tpu.memory_space<vmem>>) attributes {dimension_semantics = [], scalar_prefetch = 0 : i64, scratch_operands = 2 : i64, tpu.core_type = #tpu.core_type<tc>} {
    %c0 = arith.constant 0 : index
    %c0_0 = arith.constant 0 : index
    %0 = vector.load %arg0[%c0, %c0_0] : memref<32x16xf32, #tpu.memory_space<vmem>>, vector<32x16xf32>
    %c0_1 = arith.constant 0 : index
    %c0_2 = arith.constant 0 : index
    %1 = vector.load %arg1[%c0_1, %c0_2] : memref<32x32xf32, #tpu.memory_space<vmem>>, vector<32x32xf32>
    %c0_3 = arith.constant 0 : index
    %c0_4 = arith.constant 0 : index
    %2 = vector.load %arg2[%c0_3, %c0_4] : memref<16x528xf32, #tpu.memory_space<vmem>>, vector<16x528xf32>
    %cst = arith.constant dense<0.000000e+00> : vector<32x528xf32>
    %3 = tpu.matmul %0, %2, %cst {dimension_numbers = #tpu.dot_dimension_numbers<[1], [0], [0], [1], [0, 0, 1, 1], [], []>} : vector<32x16xf32>, vector<16x528xf32>, vector<32x528xf32> -> vector<32x528xf32>
    %4 = vector.extract_strided_slice %3 {offsets = [0, 0], sizes = [32, 256], strides = [1, 1]} : vector<32x528xf32> to vector<32x256xf32>
    %5 = arith.truncf %4 : vector<32x256xf32> to vector<32x256xbf16>
    %6 = vector.extract_strided_slice %3 {offsets = [0, 512], sizes = [32, 8], strides = [1, 1]} : vector<32x528xf32> to vector<32x8xf32>
    %7 = tpu.transpose %6, [1, 0] : vector<32x8xf32> -> vector<8x32xf32>
    %8 = vector.extract_strided_slice %3 {offsets = [0, 520], sizes = [32, 8], strides = [1, 1]} : vector<32x528xf32> to vector<32x8xf32>
    %9 = tpu.iota {dimensions = array<i32: 1>} : vector<32x256xi32>
    %10 = vector.extract_strided_slice %8 {offsets = [0, 0], sizes = [32, 1], strides = [1, 1]} : vector<32x8xf32> to vector<32x1xf32>
    %11 = vector.extract_strided_slice %7 {offsets = [0, 0], sizes = [1, 32], strides = [1, 1]} : vector<8x32xf32> to vector<1x32xf32>
    %12 = vector.broadcast %10 : vector<32x1xf32> to vector<32x32xf32>
    %13 = vector.broadcast %11 : vector<1x32xf32> to vector<32x32xf32>
    %14 = arith.addf %12, %13 : vector<32x32xf32>
    %cst_5 = arith.constant 0.000000e+00 : f32
    %15 = vector.broadcast %cst_5 : f32 to vector<32x32xf32>
    %16 = arith.cmpf oge, %14, %15 : vector<32x32xf32>
    %cst_6 = arith.constant 2.000000e-01 : f32
    %17 = vector.broadcast %cst_6 : f32 to vector<32x32xf32>
    %18 = arith.mulf %17, %14 : vector<32x32xf32>
    %19 = arith.select %16, %14, %18 : vector<32x32xi1>, vector<32x32xf32>
    %20 = arith.addf %19, %1 : vector<32x32xf32>
    %cst_7 = arith.constant dense<0xFF800000> : vector<32xf32>
    %21 = vector.multi_reduction <maximumf>, %20, %cst_7 [1] : vector<32x32xf32> to vector<32xf32>
    %22 = vector.shape_cast %21 : vector<32xf32> to vector<32x1xf32>
    %23 = vector.broadcast %22 : vector<32x1xf32> to vector<32x32xf32>
    %24 = arith.subf %20, %23 : vector<32x32xf32>
    %25 = math.exp %24 : vector<32x32xf32>
    %cst_8 = arith.constant dense<0.000000e+00> : vector<32xf32>
    %26 = vector.multi_reduction <add>, %25, %cst_8 [1] : vector<32x32xf32> to vector<32xf32>
    %27 = vector.shape_cast %26 : vector<32xf32> to vector<32x1xf32>
    %28 = tpu.reciprocal %27 {approx = true} : vector<32x1xf32> -> vector<32x1xf32>
    %29 = vector.broadcast %28 : vector<32x1xf32> to vector<32x32xf32>
    %30 = arith.mulf %25, %29 : vector<32x32xf32>
    %31 = arith.truncf %30 : vector<32x32xf32> to vector<32x32xbf16>
    %c0_9 = arith.constant 0 : index
    %c0_10 = arith.constant 0 : index
    %32 = vector.load %arg7[%c0_9, %c0_10] : memref<32x256xbf16, #tpu.memory_space<vmem>>, vector<32x32xbf16>
    tpu.vector_store %arg7[%c0_9, %c0_10], %31 {strides = array<i32>} : memref<32x256xbf16, #tpu.memory_space<vmem>>, vector<32x32xbf16>,
    %c0_i32 = arith.constant 0 : i32
    %33 = vector.broadcast %c0_i32 : i32 to vector<32x256xi32>
    %34 = arith.cmpi sge, %9, %33 : vector<32x256xi32>
    %c32_i32 = arith.constant 32 : i32
    %35 = vector.broadcast %c32_i32 : i32 to vector<32x256xi32>
    %36 = arith.cmpi slt, %9, %35 : vector<32x256xi32>
    %37 = arith.andi %34, %36 : vector<32x256xi1>
    %cst_11 = arith.constant 0.000000e+00 : f32
    %38 = arith.truncf %cst_11 : f32 to bf16
    %39 = vector.broadcast %38 : bf16 to vector<32x256xbf16>
    %40 = arith.select %37, %5, %39 : vector<32x256xi1>, vector<32x256xbf16>
    %c0_12 = arith.constant 0 : index
    %c0_13 = arith.constant 0 : index
    %41 = vector.load %arg8[%c0_12, %c0_13] : memref<256x256xbf16, #tpu.memory_space<vmem>>, vector<32x256xbf16>
    tpu.vector_store %arg8[%c0_12, %c0_13], %40 {strides = array<i32>} : memref<256x256xbf16, #tpu.memory_space<vmem>>, vector<32x256xbf16>,
    %42 = vector.extract_strided_slice %8 {offsets = [0, 1], sizes = [32, 1], strides = [1, 1]} : vector<32x8xf32> to vector<32x1xf32>
    %43 = vector.extract_strided_slice %7 {offsets = [1, 0], sizes = [1, 32], strides = [1, 1]} : vector<8x32xf32> to vector<1x32xf32>
    %44 = vector.broadcast %42 : vector<32x1xf32> to vector<32x32xf32>
    %45 = vector.broadcast %43 : vector<1x32xf32> to vector<32x32xf32>
    %46 = arith.addf %44, %45 : vector<32x32xf32>
    %cst_14 = arith.constant 0.000000e+00 : f32
    %47 = vector.broadcast %cst_14 : f32 to vector<32x32xf32>
    %48 = arith.cmpf oge, %46, %47 : vector<32x32xf32>
    %cst_15 = arith.constant 2.000000e-01 : f32
    %49 = vector.broadcast %cst_15 : f32 to vector<32x32xf32>
    %50 = arith.mulf %49, %46 : vector<32x32xf32>
    %51 = arith.select %48, %46, %50 : vector<32x32xi1>, vector<32x32xf32>
    %52 = arith.addf %51, %1 : vector<32x32xf32>
    %cst_16 = arith.constant dense<0xFF800000> : vector<32xf32>
    %53 = vector.multi_reduction <maximumf>, %52, %cst_16 [1] : vector<32x32xf32> to vector<32xf32>
    %54 = vector.shape_cast %53 : vector<32xf32> to vector<32x1xf32>
    %55 = vector.broadcast %54 : vector<32x1xf32> to vector<32x32xf32>
    %56 = arith.subf %52, %55 : vector<32x32xf32>
    %57 = math.exp %56 : vector<32x32xf32>
    %cst_17 = arith.constant dense<0.000000e+00> : vector<32xf32>
    %58 = vector.multi_reduction <add>, %57, %cst_17 [1] : vector<32x32xf32> to vector<32xf32>
    %59 = vector.shape_cast %58 : vector<32xf32> to vector<32x1xf32>
    %60 = tpu.reciprocal %59 {approx = true} : vector<32x1xf32> -> vector<32x1xf32>
    %61 = vector.broadcast %60 : vector<32x1xf32> to vector<32x32xf32>
    %62 = arith.mulf %57, %61 : vector<32x32xf32>
    %63 = arith.truncf %62 : vector<32x32xf32> to vector<32x32xbf16>
    %c0_18 = arith.constant 0 : index
    %c32 = arith.constant 32 : index
    %64 = vector.load %arg7[%c0_18, %c32] : memref<32x256xbf16, #tpu.memory_space<vmem>>, vector<32x32xbf16>
    tpu.vector_store %arg7[%c0_18, %c32], %63 {strides = array<i32>} : memref<32x256xbf16, #tpu.memory_space<vmem>>, vector<32x32xbf16>,
    %c32_i32_19 = arith.constant 32 : i32
    %65 = vector.broadcast %c32_i32_19 : i32 to vector<32x256xi32>
    %66 = arith.cmpi sge, %9, %65 : vector<32x256xi32>
    %c64_i32 = arith.constant 64 : i32
    %67 = vector.broadcast %c64_i32 : i32 to vector<32x256xi32>
    %68 = arith.cmpi slt, %9, %67 : vector<32x256xi32>
    %69 = arith.andi %66, %68 : vector<32x256xi1>
    %cst_20 = arith.constant 0.000000e+00 : f32
    %70 = arith.truncf %cst_20 : f32 to bf16
    %71 = vector.broadcast %70 : bf16 to vector<32x256xbf16>
    %72 = arith.select %69, %5, %71 : vector<32x256xi1>, vector<32x256xbf16>
    %c32_21 = arith.constant 32 : index
    %c0_22 = arith.constant 0 : index
    %73 = vector.load %arg8[%c32_21, %c0_22] : memref<256x256xbf16, #tpu.memory_space<vmem>>, vector<32x256xbf16>
    tpu.vector_store %arg8[%c32_21, %c0_22], %72 {strides = array<i32>} : memref<256x256xbf16, #tpu.memory_space<vmem>>, vector<32x256xbf16>,
    %74 = vector.extract_strided_slice %8 {offsets = [0, 2], sizes = [32, 1], strides = [1, 1]} : vector<32x8xf32> to vector<32x1xf32>
    %75 = vector.extract_strided_slice %7 {offsets = [2, 0], sizes = [1, 32], strides = [1, 1]} : vector<8x32xf32> to vector<1x32xf32>
    %76 = vector.broadcast %74 : vector<32x1xf32> to vector<32x32xf32>
    %77 = vector.broadcast %75 : vector<1x32xf32> to vector<32x32xf32>
    %78 = arith.addf %76, %77 : vector<32x32xf32>
    %cst_23 = arith.constant 0.000000e+00 : f32
    %79 = vector.broadcast %cst_23 : f32 to vector<32x32xf32>
    %80 = arith.cmpf oge, %78, %79 : vector<32x32xf32>
    %cst_24 = arith.constant 2.000000e-01 : f32
    %81 = vector.broadcast %cst_24 : f32 to vector<32x32xf32>
    %82 = arith.mulf %81, %78 : vector<32x32xf32>
    %83 = arith.select %80, %78, %82 : vector<32x32xi1>, vector<32x32xf32>
    %84 = arith.addf %83, %1 : vector<32x32xf32>
    %cst_25 = arith.constant dense<0xFF800000> : vector<32xf32>
    %85 = vector.multi_reduction <maximumf>, %84, %cst_25 [1] : vector<32x32xf32> to vector<32xf32>
    %86 = vector.shape_cast %85 : vector<32xf32> to vector<32x1xf32>
    %87 = vector.broadcast %86 : vector<32x1xf32> to vector<32x32xf32>
    %88 = arith.subf %84, %87 : vector<32x32xf32>
    %89 = math.exp %88 : vector<32x32xf32>
    %cst_26 = arith.constant dense<0.000000e+00> : vector<32xf32>
    %90 = vector.multi_reduction <add>, %89, %cst_26 [1] : vector<32x32xf32> to vector<32xf32>
    %91 = vector.shape_cast %90 : vector<32xf32> to vector<32x1xf32>
    %92 = tpu.reciprocal %91 {approx = true} : vector<32x1xf32> -> vector<32x1xf32>
    %93 = vector.broadcast %92 : vector<32x1xf32> to vector<32x32xf32>
    %94 = arith.mulf %89, %93 : vector<32x32xf32>
    %95 = arith.truncf %94 : vector<32x32xf32> to vector<32x32xbf16>
    %c0_27 = arith.constant 0 : index
    %c64 = arith.constant 64 : index
    %96 = vector.load %arg7[%c0_27, %c64] : memref<32x256xbf16, #tpu.memory_space<vmem>>, vector<32x32xbf16>
    tpu.vector_store %arg7[%c0_27, %c64], %95 {strides = array<i32>} : memref<32x256xbf16, #tpu.memory_space<vmem>>, vector<32x32xbf16>,
    %c64_i32_28 = arith.constant 64 : i32
    %97 = vector.broadcast %c64_i32_28 : i32 to vector<32x256xi32>
    %98 = arith.cmpi sge, %9, %97 : vector<32x256xi32>
    %c96_i32 = arith.constant 96 : i32
    %99 = vector.broadcast %c96_i32 : i32 to vector<32x256xi32>
    %100 = arith.cmpi slt, %9, %99 : vector<32x256xi32>
    %101 = arith.andi %98, %100 : vector<32x256xi1>
    %cst_29 = arith.constant 0.000000e+00 : f32
    %102 = arith.truncf %cst_29 : f32 to bf16
    %103 = vector.broadcast %102 : bf16 to vector<32x256xbf16>
    %104 = arith.select %101, %5, %103 : vector<32x256xi1>, vector<32x256xbf16>
    %c64_30 = arith.constant 64 : index
    %c0_31 = arith.constant 0 : index
    %105 = vector.load %arg8[%c64_30, %c0_31] : memref<256x256xbf16, #tpu.memory_space<vmem>>, vector<32x256xbf16>
    tpu.vector_store %arg8[%c64_30, %c0_31], %104 {strides = array<i32>} : memref<256x256xbf16, #tpu.memory_space<vmem>>, vector<32x256xbf16>,
    %106 = vector.extract_strided_slice %8 {offsets = [0, 3], sizes = [32, 1], strides = [1, 1]} : vector<32x8xf32> to vector<32x1xf32>
    %107 = vector.extract_strided_slice %7 {offsets = [3, 0], sizes = [1, 32], strides = [1, 1]} : vector<8x32xf32> to vector<1x32xf32>
    %108 = vector.broadcast %106 : vector<32x1xf32> to vector<32x32xf32>
    %109 = vector.broadcast %107 : vector<1x32xf32> to vector<32x32xf32>
    %110 = arith.addf %108, %109 : vector<32x32xf32>
    %cst_32 = arith.constant 0.000000e+00 : f32
    %111 = vector.broadcast %cst_32 : f32 to vector<32x32xf32>
    %112 = arith.cmpf oge, %110, %111 : vector<32x32xf32>
    %cst_33 = arith.constant 2.000000e-01 : f32
    %113 = vector.broadcast %cst_33 : f32 to vector<32x32xf32>
    %114 = arith.mulf %113, %110 : vector<32x32xf32>
    %115 = arith.select %112, %110, %114 : vector<32x32xi1>, vector<32x32xf32>
    %116 = arith.addf %115, %1 : vector<32x32xf32>
    %cst_34 = arith.constant dense<0xFF800000> : vector<32xf32>
    %117 = vector.multi_reduction <maximumf>, %116, %cst_34 [1] : vector<32x32xf32> to vector<32xf32>
    %118 = vector.shape_cast %117 : vector<32xf32> to vector<32x1xf32>
    %119 = vector.broadcast %118 : vector<32x1xf32> to vector<32x32xf32>
    %120 = arith.subf %116, %119 : vector<32x32xf32>
    %121 = math.exp %120 : vector<32x32xf32>
    %cst_35 = arith.constant dense<0.000000e+00> : vector<32xf32>
    %122 = vector.multi_reduction <add>, %121, %cst_35 [1] : vector<32x32xf32> to vector<32xf32>
    %123 = vector.shape_cast %122 : vector<32xf32> to vector<32x1xf32>
    %124 = tpu.reciprocal %123 {approx = true} : vector<32x1xf32> -> vector<32x1xf32>
    %125 = vector.broadcast %124 : vector<32x1xf32> to vector<32x32xf32>
    %126 = arith.mulf %121, %125 : vector<32x32xf32>
    %127 = arith.truncf %126 : vector<32x32xf32> to vector<32x32xbf16>
    %c0_36 = arith.constant 0 : index
    %c96 = arith.constant 96 : index
    %128 = vector.load %arg7[%c0_36, %c96] : memref<32x256xbf16, #tpu.memory_space<vmem>>, vector<32x32xbf16>
    tpu.vector_store %arg7[%c0_36, %c96], %127 {strides = array<i32>} : memref<32x256xbf16, #tpu.memory_space<vmem>>, vector<32x32xbf16>,
    %c96_i32_37 = arith.constant 96 : i32
    %129 = vector.broadcast %c96_i32_37 : i32 to vector<32x256xi32>
    %130 = arith.cmpi sge, %9, %129 : vector<32x256xi32>
    %c128_i32 = arith.constant 128 : i32
    %131 = vector.broadcast %c128_i32 : i32 to vector<32x256xi32>
    %132 = arith.cmpi slt, %9, %131 : vector<32x256xi32>
    %133 = arith.andi %130, %132 : vector<32x256xi1>
    %cst_38 = arith.constant 0.000000e+00 : f32
    %134 = arith.truncf %cst_38 : f32 to bf16
    %135 = vector.broadcast %134 : bf16 to vector<32x256xbf16>
    %136 = arith.select %133, %5, %135 : vector<32x256xi1>, vector<32x256xbf16>
    %c96_39 = arith.constant 96 : index
    %c0_40 = arith.constant 0 : index
    %137 = vector.load %arg8[%c96_39, %c0_40] : memref<256x256xbf16, #tpu.memory_space<vmem>>, vector<32x256xbf16>
    tpu.vector_store %arg8[%c96_39, %c0_40], %136 {strides = array<i32>} : memref<256x256xbf16, #tpu.memory_space<vmem>>, vector<32x256xbf16>,
    %138 = vector.extract_strided_slice %8 {offsets = [0, 4], sizes = [32, 1], strides = [1, 1]} : vector<32x8xf32> to vector<32x1xf32>
    %139 = vector.extract_strided_slice %7 {offsets = [4, 0], sizes = [1, 32], strides = [1, 1]} : vector<8x32xf32> to vector<1x32xf32>
    %140 = vector.broadcast %138 : vector<32x1xf32> to vector<32x32xf32>
    %141 = vector.broadcast %139 : vector<1x32xf32> to vector<32x32xf32>
    %142 = arith.addf %140, %141 : vector<32x32xf32>
    %cst_41 = arith.constant 0.000000e+00 : f32
    %143 = vector.broadcast %cst_41 : f32 to vector<32x32xf32>
    %144 = arith.cmpf oge, %142, %143 : vector<32x32xf32>
    %cst_42 = arith.constant 2.000000e-01 : f32
    %145 = vector.broadcast %cst_42 : f32 to vector<32x32xf32>
    %146 = arith.mulf %145, %142 : vector<32x32xf32>
    %147 = arith.select %144, %142, %146 : vector<32x32xi1>, vector<32x32xf32>
    %148 = arith.addf %147, %1 : vector<32x32xf32>
    %cst_43 = arith.constant dense<0xFF800000> : vector<32xf32>
    %149 = vector.multi_reduction <maximumf>, %148, %cst_43 [1] : vector<32x32xf32> to vector<32xf32>
    %150 = vector.shape_cast %149 : vector<32xf32> to vector<32x1xf32>
    %151 = vector.broadcast %150 : vector<32x1xf32> to vector<32x32xf32>
    %152 = arith.subf %148, %151 : vector<32x32xf32>
    %153 = math.exp %152 : vector<32x32xf32>
    %cst_44 = arith.constant dense<0.000000e+00> : vector<32xf32>
    %154 = vector.multi_reduction <add>, %153, %cst_44 [1] : vector<32x32xf32> to vector<32xf32>
    %155 = vector.shape_cast %154 : vector<32xf32> to vector<32x1xf32>
    %156 = tpu.reciprocal %155 {approx = true} : vector<32x1xf32> -> vector<32x1xf32>
    %157 = vector.broadcast %156 : vector<32x1xf32> to vector<32x32xf32>
    %158 = arith.mulf %153, %157 : vector<32x32xf32>
    %159 = arith.truncf %158 : vector<32x32xf32> to vector<32x32xbf16>
    %c0_45 = arith.constant 0 : index
    %c128 = arith.constant 128 : index
    %160 = vector.load %arg7[%c0_45, %c128] : memref<32x256xbf16, #tpu.memory_space<vmem>>, vector<32x32xbf16>
    tpu.vector_store %arg7[%c0_45, %c128], %159 {strides = array<i32>} : memref<32x256xbf16, #tpu.memory_space<vmem>>, vector<32x32xbf16>,
    %c128_i32_46 = arith.constant 128 : i32
    %161 = vector.broadcast %c128_i32_46 : i32 to vector<32x256xi32>
    %162 = arith.cmpi sge, %9, %161 : vector<32x256xi32>
    %c160_i32 = arith.constant 160 : i32
    %163 = vector.broadcast %c160_i32 : i32 to vector<32x256xi32>
    %164 = arith.cmpi slt, %9, %163 : vector<32x256xi32>
    %165 = arith.andi %162, %164 : vector<32x256xi1>
    %cst_47 = arith.constant 0.000000e+00 : f32
    %166 = arith.truncf %cst_47 : f32 to bf16
    %167 = vector.broadcast %166 : bf16 to vector<32x256xbf16>
    %168 = arith.select %165, %5, %167 : vector<32x256xi1>, vector<32x256xbf16>
    %c128_48 = arith.constant 128 : index
    %c0_49 = arith.constant 0 : index
    %169 = vector.load %arg8[%c128_48, %c0_49] : memref<256x256xbf16, #tpu.memory_space<vmem>>, vector<32x256xbf16>
    tpu.vector_store %arg8[%c128_48, %c0_49], %168 {strides = array<i32>} : memref<256x256xbf16, #tpu.memory_space<vmem>>, vector<32x256xbf16>,
    %170 = vector.extract_strided_slice %8 {offsets = [0, 5], sizes = [32, 1], strides = [1, 1]} : vector<32x8xf32> to vector<32x1xf32>
    %171 = vector.extract_strided_slice %7 {offsets = [5, 0], sizes = [1, 32], strides = [1, 1]} : vector<8x32xf32> to vector<1x32xf32>
    %172 = vector.broadcast %170 : vector<32x1xf32> to vector<32x32xf32>
    %173 = vector.broadcast %171 : vector<1x32xf32> to vector<32x32xf32>
    %174 = arith.addf %172, %173 : vector<32x32xf32>
    %cst_50 = arith.constant 0.000000e+00 : f32
    %175 = vector.broadcast %cst_50 : f32 to vector<32x32xf32>
    %176 = arith.cmpf oge, %174, %175 : vector<32x32xf32>
    %cst_51 = arith.constant 2.000000e-01 : f32
    %177 = vector.broadcast %cst_51 : f32 to vector<32x32xf32>
    %178 = arith.mulf %177, %174 : vector<32x32xf32>
    %179 = arith.select %176, %174, %178 : vector<32x32xi1>, vector<32x32xf32>
    %180 = arith.addf %179, %1 : vector<32x32xf32>
    %cst_52 = arith.constant dense<0xFF800000> : vector<32xf32>
    %181 = vector.multi_reduction <maximumf>, %180, %cst_52 [1] : vector<32x32xf32> to vector<32xf32>
    %182 = vector.shape_cast %181 : vector<32xf32> to vector<32x1xf32>
    %183 = vector.broadcast %182 : vector<32x1xf32> to vector<32x32xf32>
    %184 = arith.subf %180, %183 : vector<32x32xf32>
    %185 = math.exp %184 : vector<32x32xf32>
    %cst_53 = arith.constant dense<0.000000e+00> : vector<32xf32>
    %186 = vector.multi_reduction <add>, %185, %cst_53 [1] : vector<32x32xf32> to vector<32xf32>
    %187 = vector.shape_cast %186 : vector<32xf32> to vector<32x1xf32>
    %188 = tpu.reciprocal %187 {approx = true} : vector<32x1xf32> -> vector<32x1xf32>
    %189 = vector.broadcast %188 : vector<32x1xf32> to vector<32x32xf32>
    %190 = arith.mulf %185, %189 : vector<32x32xf32>
    %191 = arith.truncf %190 : vector<32x32xf32> to vector<32x32xbf16>
    %c0_54 = arith.constant 0 : index
    %c160 = arith.constant 160 : index
    %192 = vector.load %arg7[%c0_54, %c160] : memref<32x256xbf16, #tpu.memory_space<vmem>>, vector<32x32xbf16>
    tpu.vector_store %arg7[%c0_54, %c160], %191 {strides = array<i32>} : memref<32x256xbf16, #tpu.memory_space<vmem>>, vector<32x32xbf16>,
    %c160_i32_55 = arith.constant 160 : i32
    %193 = vector.broadcast %c160_i32_55 : i32 to vector<32x256xi32>
    %194 = arith.cmpi sge, %9, %193 : vector<32x256xi32>
    %c192_i32 = arith.constant 192 : i32
    %195 = vector.broadcast %c192_i32 : i32 to vector<32x256xi32>
    %196 = arith.cmpi slt, %9, %195 : vector<32x256xi32>
    %197 = arith.andi %194, %196 : vector<32x256xi1>
    %cst_56 = arith.constant 0.000000e+00 : f32
    %198 = arith.truncf %cst_56 : f32 to bf16
    %199 = vector.broadcast %198 : bf16 to vector<32x256xbf16>
    %200 = arith.select %197, %5, %199 : vector<32x256xi1>, vector<32x256xbf16>
    %c160_57 = arith.constant 160 : index
    %c0_58 = arith.constant 0 : index
    %201 = vector.load %arg8[%c160_57, %c0_58] : memref<256x256xbf16, #tpu.memory_space<vmem>>, vector<32x256xbf16>
    tpu.vector_store %arg8[%c160_57, %c0_58], %200 {strides = array<i32>} : memref<256x256xbf16, #tpu.memory_space<vmem>>, vector<32x256xbf16>,
    %202 = vector.extract_strided_slice %8 {offsets = [0, 6], sizes = [32, 1], strides = [1, 1]} : vector<32x8xf32> to vector<32x1xf32>
    %203 = vector.extract_strided_slice %7 {offsets = [6, 0], sizes = [1, 32], strides = [1, 1]} : vector<8x32xf32> to vector<1x32xf32>
    %204 = vector.broadcast %202 : vector<32x1xf32> to vector<32x32xf32>
    %205 = vector.broadcast %203 : vector<1x32xf32> to vector<32x32xf32>
    %206 = arith.addf %204, %205 : vector<32x32xf32>
    %cst_59 = arith.constant 0.000000e+00 : f32
    %207 = vector.broadcast %cst_59 : f32 to vector<32x32xf32>
    %208 = arith.cmpf oge, %206, %207 : vector<32x32xf32>
    %cst_60 = arith.constant 2.000000e-01 : f32
    %209 = vector.broadcast %cst_60 : f32 to vector<32x32xf32>
    %210 = arith.mulf %209, %206 : vector<32x32xf32>
    %211 = arith.select %208, %206, %210 : vector<32x32xi1>, vector<32x32xf32>
    %212 = arith.addf %211, %1 : vector<32x32xf32>
    %cst_61 = arith.constant dense<0xFF800000> : vector<32xf32>
    %213 = vector.multi_reduction <maximumf>, %212, %cst_61 [1] : vector<32x32xf32> to vector<32xf32>
    %214 = vector.shape_cast %213 : vector<32xf32> to vector<32x1xf32>
    %215 = vector.broadcast %214 : vector<32x1xf32> to vector<32x32xf32>
    %216 = arith.subf %212, %215 : vector<32x32xf32>
    %217 = math.exp %216 : vector<32x32xf32>
    %cst_62 = arith.constant dense<0.000000e+00> : vector<32xf32>
    %218 = vector.multi_reduction <add>, %217, %cst_62 [1] : vector<32x32xf32> to vector<32xf32>
    %219 = vector.shape_cast %218 : vector<32xf32> to vector<32x1xf32>
    %220 = tpu.reciprocal %219 {approx = true} : vector<32x1xf32> -> vector<32x1xf32>
    %221 = vector.broadcast %220 : vector<32x1xf32> to vector<32x32xf32>
    %222 = arith.mulf %217, %221 : vector<32x32xf32>
    %223 = arith.truncf %222 : vector<32x32xf32> to vector<32x32xbf16>
    %c0_63 = arith.constant 0 : index
    %c192 = arith.constant 192 : index
    %224 = vector.load %arg7[%c0_63, %c192] : memref<32x256xbf16, #tpu.memory_space<vmem>>, vector<32x32xbf16>
    tpu.vector_store %arg7[%c0_63, %c192], %223 {strides = array<i32>} : memref<32x256xbf16, #tpu.memory_space<vmem>>, vector<32x32xbf16>,
    %c192_i32_64 = arith.constant 192 : i32
    %225 = vector.broadcast %c192_i32_64 : i32 to vector<32x256xi32>
    %226 = arith.cmpi sge, %9, %225 : vector<32x256xi32>
    %c224_i32 = arith.constant 224 : i32
    %227 = vector.broadcast %c224_i32 : i32 to vector<32x256xi32>
    %228 = arith.cmpi slt, %9, %227 : vector<32x256xi32>
    %229 = arith.andi %226, %228 : vector<32x256xi1>
    %cst_65 = arith.constant 0.000000e+00 : f32
    %230 = arith.truncf %cst_65 : f32 to bf16
    %231 = vector.broadcast %230 : bf16 to vector<32x256xbf16>
    %232 = arith.select %229, %5, %231 : vector<32x256xi1>, vector<32x256xbf16>
    %c192_66 = arith.constant 192 : index
    %c0_67 = arith.constant 0 : index
    %233 = vector.load %arg8[%c192_66, %c0_67] : memref<256x256xbf16, #tpu.memory_space<vmem>>, vector<32x256xbf16>
    tpu.vector_store %arg8[%c192_66, %c0_67], %232 {strides = array<i32>} : memref<256x256xbf16, #tpu.memory_space<vmem>>, vector<32x256xbf16>,
    %234 = vector.extract_strided_slice %8 {offsets = [0, 7], sizes = [32, 1], strides = [1, 1]} : vector<32x8xf32> to vector<32x1xf32>
    %235 = vector.extract_strided_slice %7 {offsets = [7, 0], sizes = [1, 32], strides = [1, 1]} : vector<8x32xf32> to vector<1x32xf32>
    %236 = vector.broadcast %234 : vector<32x1xf32> to vector<32x32xf32>
    %237 = vector.broadcast %235 : vector<1x32xf32> to vector<32x32xf32>
    %238 = arith.addf %236, %237 : vector<32x32xf32>
    %cst_68 = arith.constant 0.000000e+00 : f32
    %239 = vector.broadcast %cst_68 : f32 to vector<32x32xf32>
    %240 = arith.cmpf oge, %238, %239 : vector<32x32xf32>
    %cst_69 = arith.constant 2.000000e-01 : f32
    %241 = vector.broadcast %cst_69 : f32 to vector<32x32xf32>
    %242 = arith.mulf %241, %238 : vector<32x32xf32>
    %243 = arith.select %240, %238, %242 : vector<32x32xi1>, vector<32x32xf32>
    %244 = arith.addf %243, %1 : vector<32x32xf32>
    %cst_70 = arith.constant dense<0xFF800000> : vector<32xf32>
    %245 = vector.multi_reduction <maximumf>, %244, %cst_70 [1] : vector<32x32xf32> to vector<32xf32>
    %246 = vector.shape_cast %245 : vector<32xf32> to vector<32x1xf32>
    %247 = vector.broadcast %246 : vector<32x1xf32> to vector<32x32xf32>
    %248 = arith.subf %244, %247 : vector<32x32xf32>
    %249 = math.exp %248 : vector<32x32xf32>
    %cst_71 = arith.constant dense<0.000000e+00> : vector<32xf32>
    %250 = vector.multi_reduction <add>, %249, %cst_71 [1] : vector<32x32xf32> to vector<32xf32>
    %251 = vector.shape_cast %250 : vector<32xf32> to vector<32x1xf32>
    %252 = tpu.reciprocal %251 {approx = true} : vector<32x1xf32> -> vector<32x1xf32>
    %253 = vector.broadcast %252 : vector<32x1xf32> to vector<32x32xf32>
    %254 = arith.mulf %249, %253 : vector<32x32xf32>
    %255 = arith.truncf %254 : vector<32x32xf32> to vector<32x32xbf16>
    %c0_72 = arith.constant 0 : index
    %c224 = arith.constant 224 : index
    %256 = vector.load %arg7[%c0_72, %c224] : memref<32x256xbf16, #tpu.memory_space<vmem>>, vector<32x32xbf16>
    tpu.vector_store %arg7[%c0_72, %c224], %255 {strides = array<i32>} : memref<32x256xbf16, #tpu.memory_space<vmem>>, vector<32x32xbf16>,
    %c224_i32_73 = arith.constant 224 : i32
    %257 = vector.broadcast %c224_i32_73 : i32 to vector<32x256xi32>
    %258 = arith.cmpi sge, %9, %257 : vector<32x256xi32>
    %c256_i32 = arith.constant 256 : i32
    %259 = vector.broadcast %c256_i32 : i32 to vector<32x256xi32>
    %260 = arith.cmpi slt, %9, %259 : vector<32x256xi32>
    %261 = arith.andi %258, %260 : vector<32x256xi1>
    %cst_74 = arith.constant 0.000000e+00 : f32
    %262 = arith.truncf %cst_74 : f32 to bf16
    %263 = vector.broadcast %262 : bf16 to vector<32x256xbf16>
    %264 = arith.select %261, %5, %263 : vector<32x256xi1>, vector<32x256xbf16>
    %c224_75 = arith.constant 224 : index
    %c0_76 = arith.constant 0 : index
    %265 = vector.load %arg8[%c224_75, %c0_76] : memref<256x256xbf16, #tpu.memory_space<vmem>>, vector<32x256xbf16>
    tpu.vector_store %arg8[%c224_75, %c0_76], %264 {strides = array<i32>} : memref<256x256xbf16, #tpu.memory_space<vmem>>, vector<32x256xbf16>,
    %c0_77 = arith.constant 0 : index
    %c0_78 = arith.constant 0 : index
    %266 = vector.load %arg7[%c0_77, %c0_78] : memref<32x256xbf16, #tpu.memory_space<vmem>>, vector<32x256xbf16>
    %c0_79 = arith.constant 0 : index
    %c0_80 = arith.constant 0 : index
    %267 = vector.load %arg8[%c0_79, %c0_80] : memref<256x256xbf16, #tpu.memory_space<vmem>>, vector<256x256xbf16>
    %cst_81 = arith.constant dense<0.000000e+00> : vector<32x256xf32>
    %268 = tpu.matmul %266, %267, %cst_81 {dimension_numbers = #tpu.dot_dimension_numbers<[1], [0], [0], [1], [0, 0, 1, 1], [], []>} : vector<32x256xbf16>, vector<256x256xbf16>, vector<32x256xf32> -> vector<32x256xf32>
    %269 = vector.extract_strided_slice %3 {offsets = [0, 256], sizes = [32, 256], strides = [1, 1]} : vector<32x528xf32> to vector<32x256xf32>
    %270 = arith.addf %268, %269 : vector<32x256xf32>
    %c0_82 = arith.constant 0 : index
    %c0_83 = arith.constant 0 : index
    %271 = vector.load %arg3[%c0_82, %c0_83] : memref<1x256xf32, #tpu.memory_space<vmem>>, vector<1x256xf32>
    %272 = vector.broadcast %271 : vector<1x256xf32> to vector<32x256xf32>
    %273 = arith.addf %270, %272 : vector<32x256xf32>
    %cst_84 = arith.constant 0.000000e+00 : f32
    %274 = vector.broadcast %cst_84 : f32 to vector<32x256xf32>
    %275 = arith.maximumf %273, %274 : vector<32x256xf32>
    %c0_85 = arith.constant 0 : index
    %c0_86 = arith.constant 0 : index
    %276 = vector.load %arg4[%c0_85, %c0_86] : memref<256x256xf32, #tpu.memory_space<vmem>>, vector<256x256xf32>
    %cst_87 = arith.constant dense<0.000000e+00> : vector<32x256xf32>
    %277 = tpu.matmul %275, %276, %cst_87 {dimension_numbers = #tpu.dot_dimension_numbers<[1], [0], [0], [1], [0, 0, 1, 1], [], []>} : vector<32x256xf32>, vector<256x256xf32>, vector<32x256xf32> -> vector<32x256xf32>
    %278 = vector.extract_strided_slice %277 {offsets = [0, 0], sizes = [32, 128], strides = [1, 1]} : vector<32x256xf32> to vector<32x128xf32>
    %279 = vector.extract_strided_slice %277 {offsets = [0, 128], sizes = [32, 128], strides = [1, 1]} : vector<32x256xf32> to vector<32x128xf32>
    %280 = vector.extract_strided_slice %277 {offsets = [0, 32], sizes = [32, 1], strides = [1, 1]} : vector<32x256xf32> to vector<32x1xf32>
    %281 = tpu.transpose %280, [1, 0] : vector<32x1xf32> -> vector<1x32xf32>
    %282 = vector.extract_strided_slice %277 {offsets = [0, 33], sizes = [32, 1], strides = [1, 1]} : vector<32x256xf32> to vector<32x1xf32>
    %283 = vector.broadcast %282 : vector<32x1xf32> to vector<32x32xf32>
    %284 = vector.broadcast %281 : vector<1x32xf32> to vector<32x32xf32>
    %285 = arith.addf %283, %284 : vector<32x32xf32>
    %cst_88 = arith.constant 0.000000e+00 : f32
    %286 = vector.broadcast %cst_88 : f32 to vector<32x32xf32>
    %287 = arith.cmpf oge, %285, %286 : vector<32x32xf32>
    %cst_89 = arith.constant 2.000000e-01 : f32
    %288 = vector.broadcast %cst_89 : f32 to vector<32x32xf32>
    %289 = arith.mulf %288, %285 : vector<32x32xf32>
    %290 = arith.select %287, %285, %289 : vector<32x32xi1>, vector<32x32xf32>
    %291 = arith.addf %290, %1 : vector<32x32xf32>
    %cst_90 = arith.constant dense<0xFF800000> : vector<32xf32>
    %292 = vector.multi_reduction <maximumf>, %291, %cst_90 [1] : vector<32x32xf32> to vector<32xf32>
    %293 = vector.shape_cast %292 : vector<32xf32> to vector<32x1xf32>
    %294 = vector.broadcast %293 : vector<32x1xf32> to vector<32x32xf32>
    %295 = arith.subf %291, %294 : vector<32x32xf32>
    %296 = math.exp %295 : vector<32x32xf32>
    %cst_91 = arith.constant dense<0.000000e+00> : vector<32xf32>
    %297 = vector.multi_reduction <add>, %296, %cst_91 [1] : vector<32x32xf32> to vector<32xf32>
    %298 = vector.shape_cast %297 : vector<32xf32> to vector<32x1xf32>
    %299 = tpu.reciprocal %298 {approx = true} : vector<32x1xf32> -> vector<32x1xf32>
    %300 = vector.broadcast %299 : vector<32x1xf32> to vector<32x32xf32>
    %301 = arith.mulf %296, %300 : vector<32x32xf32>
    %302 = arith.truncf %301 : vector<32x32xf32> to vector<32x32xbf16>
    %303 = arith.truncf %278 : vector<32x128xf32> to vector<32x128xbf16>
    %cst_92 = arith.constant dense<0.000000e+00> : vector<32x128xf32>
    %304 = tpu.matmul %302, %303, %cst_92 {dimension_numbers = #tpu.dot_dimension_numbers<[1], [0], [0], [1], [0, 0, 1, 1], [], []>} : vector<32x32xbf16>, vector<32x128xbf16>, vector<32x128xf32> -> vector<32x128xf32>
    %305 = arith.addf %304, %279 : vector<32x128xf32>
    %c0_93 = arith.constant 0 : index
    %c0_94 = arith.constant 0 : index
    %306 = vector.load %arg5[%c0_93, %c0_94] : memref<1x128xf32, #tpu.memory_space<vmem>>, vector<1x128xf32>
    %307 = vector.broadcast %306 : vector<1x128xf32> to vector<32x128xf32>
    %308 = arith.addf %305, %307 : vector<32x128xf32>
    %c0_95 = arith.constant 0 : index
    %c0_96 = arith.constant 0 : index
    %309 = vector.load %arg6[%c0_95, %c0_96] : memref<32x128xf32, #tpu.memory_space<vmem>>, vector<32x128xf32>
    tpu.vector_store %arg6[%c0_95, %c0_96], %308 {strides = array<i32>} : memref<32x128xf32, #tpu.memory_space<vmem>>, vector<32x128xf32>,
    return
  }
}

</mosaic_0001>

<llo_original>
// kernel: gat2_forward.1
$region0: #{gat2_forward.1}
  #allocation0 [shape = 'u32[]', space=smem, size = 0x4, offset = 0x4, fixed_abs, tag = 'smem constant byte address 0x4 - core index']
  #allocation1 [shape = 'u32[144,128]{1,0:T(1,128)}', space=vmem, size = 0x12000, scoped, tag = 'internal scratch']
  #allocation2 [shape = 'bf16[32,256]{1,0:T(8,128)(2,1)}', space=vmem, size = 0x4000, scoped, tag = 'scratch operand']
  #allocation3 [shape = 'bf16[256,256]{1,0:T(8,128)(2,1)}', space=vmem, size = 0x20000, scoped, tag = 'scratch operand']
  %s0 = inlined_call_operand.vmem [shape: f32[32,16], index: 0, kind: input, shape index: {}]
  %s1 = inlined_call_operand.vmem [shape: f32[32,32], index: 1, kind: input, shape index: {}]
  %s2 = inlined_call_operand.hbm [shape: f32[16,528], index: 2, kind: input, shape index: {}]
  %s3 = inlined_call_operand.vmem [shape: f32[1,256], index: 3, kind: input, shape index: {}]
  %s4 = inlined_call_operand.hbm [shape: f32[256,256], index: 4, kind: input, shape index: {}]
  %s5 = inlined_call_operand.vmem [shape: f32[1,128], index: 5, kind: input, shape index: {}]
  %s6 = inlined_call_operand.hbm [shape: f32[32,128], index: 6, kind: output, shape index: {}]
  %s7 = sld [smem:[#allocation0]]
  $region42: #{gat2_forward.1} parent=0
    _
  %s9 = ssub.s32 1, %s7
  %s10 = scalar_select 0, %s9, %s7
  $region1: #{gat2_forward.1} parent=0
    #allocation4 [shape = 'u8[40960]{0}', space=vmem, size = 0xa000, scoped, tag = 'input window, operand 2, single buffered']
    #allocation5 [shape = 's32[1]{0}', space=sflag, size = 0x4, scoped, tag = 'scoped memory for gat2_forward.1']
    #allocation6 [shape = 's32[1]{0}', space=sflag, size = 0x4, scoped, tag = 'scoped memory for gat2_forward.1']
    #allocation7 [shape = 'u8[262144]{0}', space=vmem, size = 0x40000, scoped, tag = 'input window, operand 4, single buffered']
    #allocation8 [shape = 's32[1]{0}', space=sflag, size = 0x4, scoped, tag = 'scoped memory for gat2_forward.1']
    #allocation9 [shape = 'u8[16384]{0}', space=vmem, size = 0x4000, scoped, tag = 'output window, operand 0, single buffered']
    %11 = vsyncpa [#allocation5], 0
    %12 = vsyncpa [#allocation8], 0
    %13 = vsyncpa [#allocation6], 0
    // Predicated region
    $region2: #{gat2_forward.1} parent=1 // pred_check
      _
    $region3: #{gat2_forward.1} parent=1 // pred_check_branch
      %15 = sbr.rel (0) target = $region5
    $region4: #{gat2_forward.1} parent=1 // pred_region
      _
    $region5: #{gat2_forward.1} parent=1 // pred_fallthru
      _
    // Predicated region
    $region6: #{gat2_forward.1} parent=1 // pred_check
      _
    $region7: #{gat2_forward.1} parent=1 // pred_check_branch
      %17 = sbr.rel (0) target = $region9
    $region8: #{gat2_forward.1} parent=1 // pred_region
      _
    $region9: #{gat2_forward.1} parent=1 // pred_fallthru
      _
    // Predicated region
    $region10: #{gat2_forward.1} parent=1 // pred_check
      _
    $region11: #{gat2_forward.1} parent=1 // pred_check_branch
      %19 = sbr.rel (0) target = $region13
    $region12: #{gat2_forward.1} parent=1 // pred_region
      %s21 = ssub.s32 1280, 1280
      %22 = vsyncadd [#allocation5], %s21
      %s23 = sshll.u32 [#allocation4], 4
      %s24 = int_to_ptr.vmem [resolvable:$true] %s23
      %29 = dma.hbm_to_vmem [thread:$0]  %s2, 1280, %s24, [#allocation5], 640, 640, 40
    $region13: #{gat2_forward.1} parent=1 // pred_fallthru
      _
    // Predicated region
    $region14: #{gat2_forward.1} parent=1 // pred_check
      _
    $region15: #{gat2_forward.1} parent=1 // pred_check_branch
      %31 = sbr.rel (0) target = $region17
    $region16: #{gat2_forward.1} parent=1 // pred_region
      _
    $region17: #{gat2_forward.1} parent=1 // pred_fallthru
      _
    // Predicated region
    $region18: #{gat2_forward.1} parent=1 // pred_check
      _
    $region19: #{gat2_forward.1} parent=1 // pred_check_branch
      %33 = sbr.rel (0) target = $region21
    $region20: #{gat2_forward.1} parent=1 // pred_region
      %s35 = ssub.s32 8192, 8192
      %36 = vsyncadd [#allocation8], %s35
      %s37 = sshll.u32 [#allocation7], 4
      %s38 = int_to_ptr.vmem [resolvable:$true] %s37
      %43 = dma.hbm_to_vmem [thread:$0]  %s4, 8192, %s38, [#allocation8], 256, 256, 16
    $region21: #{gat2_forward.1} parent=1 // pred_fallthru
      _
    // Predicated region
    $region22: #{gat2_forward.1} parent=1 // pred_check
      _
    $region23: #{gat2_forward.1} parent=1 // pred_check_branch
      %45 = sbr.rel (0) target = $region25
    $region24: #{gat2_forward.1} parent=1 // pred_region
      _
    $region25: #{gat2_forward.1} parent=1 // pred_fallthru
      _
    // Predicated region
    $region26: #{gat2_forward.1} parent=1 // pred_check
      _
    $region27: #{gat2_forward.1} parent=1 // pred_check_branch
      %47 = sbr.rel (0) target = $region29
    $region28: #{gat2_forward.1} parent=1 // pred_region
      %48 = dma.done [#allocation5], 1280
    $region29: #{gat2_forward.1} parent=1 // pred_fallthru
      _
    // Predicated region
    $region30: #{gat2_forward.1} parent=1 // pred_check
      _
    $region31: #{gat2_forward.1} parent=1 // pred_check_branch
      %50 = sbr.rel (0) target = $region33
    $region32: #{gat2_forward.1} parent=1 // pred_region
      %51 = dma.done [#allocation8], 8192
    $region33: #{gat2_forward.1} parent=1 // pred_fallthru
      _
    %v55 = vld [vmem:[%s0] sm:$0xff]
    %v56 = vld [vmem:[%s0 + $0x8] sm:$0xff]
    %v57 = vld [vmem:[%s0 + $0x10] sm:$0xff]
    %v58 = vld [vmem:[%s0 + $0x18] sm:$0xff]
    %v59 = vld [vmem:[%s1] sm:$0xff]
    %v60 = vld [vmem:[%s1 + $0x8] sm:$0xff]
    %v61 = vld [vmem:[%s1 + $0x10] sm:$0xff]
    %v62 = vld [vmem:[%s1 + $0x18] sm:$0xff]
    %v63 = vld [vmem:[#allocation4] sm:$0xff]
    %v64 = vld [vmem:[#allocation4 + $0x8] sm:$0xff]
    %v65 = vld [vmem:[#allocation4 + $0x10] sm:$0xff]
    %v66 = vld [vmem:[#allocation4 + $0x18] sm:$0xff]
    %v67 = vld [vmem:[#allocation4 + $0x20] sm:$0xff]
    %v68 = vld [vmem:[#allocation4 + $0x28] sm:$0xff]
    %v69 = vld [vmem:[#allocation4 + $0x30] sm:$0xff]
    %v70 = vld [vmem:[#allocation4 + $0x38] sm:$0xff]
    %v71 = vld [vmem:[#allocation4 + $0x40] sm:$0xff]
    %v72 = vld [vmem:[#allocation4 + $0x48] sm:$0xff]
    %vm73 = vcmask 130048
    %v75 = vsel %vm73, %v55, 0
    %v78 = vsel %vm73, %v56, 0
    %v81 = vsel %vm73, %v57, 0
    %v84 = vsel %vm73, %v58, 0
    %86 = vmatprep.subr.mxu0 0.0
    %87 = vmatpush1.msra.mxu0 0.0
    %88 = vmatprep.subr.mxu0 0.0
    %89 = vmatpush1.msra.mxu0 0.0
    %90 = vmatprep.subr.mxu0 0.0
    %91 = vmatpush1.msra.mxu0 0.0
    %92 = vmatprep.subr.mxu0 0.0
    %93 = vmatpush1.msra.mxu0 0.0
    %94 = vmatprep.subr.mxu0 0.0
    %95 = vmatpush1.msra.mxu0 0.0
    %96 = vmatprep.subr.mxu0 0.0
    %97 = vmatpush1.msra.mxu0 0.0
    %98 = vmatprep.subr.mxu0 0.0
    %99 = vmatpush1.msra.mxu0 0.0
    %100 = vmatprep.subr.mxu0 0.0
    %101 = vmatpush1.msra.mxu0 0.0
    %102 = vmatprep.subr.mxu0 0.0
    %103 = vmatpush1.msra.mxu0 0.0
    %104 = vmatprep.subr.mxu0 0.0
    %105 = vmatpush1.msra.mxu0 0.0
    %106 = vmatprep.subr.mxu0 0.0
    %107 = vmatpush1.msra.mxu0 0.0
    %108 = vmatprep.subr.mxu0 0.0
    %109 = vmatpush1.msra.mxu0 0.0
    %110 = vmatprep.subr.mxu0 0.0
    %111 = vmatpush1.msra.mxu0 0.0
    %112 = vmatprep.subr.mxu0 0.0
    %113 = vmatpush1.msra.mxu0 0.0
    %114 = vmatprep.subr.mxu0 %v69
    %115 = vmatpush1.msra.mxu0 %v68
    %116 = vmatprep.subr.mxu0 %v64
    %117 = vmatpush1.msra.mxu0 %v63
    %118 = vmatprep.subr.mxu0 0.0
    %119 = vmatpush2.msra.mxu0 0.0
    %120 = vmatprep.subr.mxu0 0.0
    %121 = vmatpush2.msra.mxu0 0.0
    %122 = vmatprep.subr.mxu0 0.0
    %123 = vmatpush2.msra.mxu0 0.0
    %124 = vmatprep.subr.mxu0 0.0
    %125 = vmatpush2.msra.mxu0 0.0
    %126 = vmatprep.subr.mxu0 0.0
    %127 = vmatpush2.msra.mxu0 0.0
    %128 = vmatprep.subr.mxu0 0.0
    %129 = vmatpush2.msra.mxu0 0.0
    %130 = vmatprep.subr.mxu0 0.0
    %131 = vmatpush2.msra.mxu0 0.0
    %132 = vmatprep.subr.mxu0 0.0
    %133 = vmatpush2.msra.mxu0 0.0
    %134 = vmatprep.subr.mxu0 0.0
    %135 = vmatpush2.msra.mxu0 0.0
    %136 = vmatprep.subr.mxu0 0.0
    %137 = vmatpush2.msra.mxu0 0.0
    %138 = vmatprep.subr.mxu0 0.0
    %139 = vmatpush2.msra.mxu0 0.0
    %140 = vmatprep.subr.mxu0 0.0
    %141 = vmatpush2.msra.mxu0 0.0
    %142 = vmatprep.subr.mxu0 0.0
    %143 = vmatpush2.msra.mxu0 0.0
    %144 = vmatprep.subr.mxu0 0.0
    %145 = vmatpush2.msra.mxu0 0.0
    %146 = vmatprep.subr.mxu0 0.0
    %147 = vmatpush2.msra.mxu0 0.0
    %148 = vmatprep.subr.mxu0 0.0
    %149 = vmatpush2.msra.mxu0 0.0
    %150 = vmatprep.mubr.f32.mxu0 0.0
    %151 = vmatmul.mubr.f32.gmra.mxu0 %v75
    %v152 = vpop.f32.mrf.mxu0
    %v153 = vadd.f32 0.0, %v152
    %v154 = vpop.f32.mrf.mxu0
    %v155 = vadd.f32 0.0, %v154
    %156 = vmatprep.mubr.f32.mxu0 0.0
    %157 = vmatmul.mubr.f32.gmra.mxu0 %v78
    %v158 = vpop.f32.mrf.mxu0
    %v159 = vadd.f32 0.0, %v158
    %v160 = vpop.f32.mrf.mxu0
    %v161 = vadd.f32 0.0, %v160
    %162 = vmatprep.mubr.f32.mxu0 0.0
    %163 = vmatmul.mubr.f32.gmra.mxu0 %v81
    %v164 = vpop.f32.mrf.mxu0
    %v165 = vadd.f32 0.0, %v164
    %v166 = vpop.f32.mrf.mxu0
    %v167 = vadd.f32 0.0, %v166
    %168 = vmatprep.mubr.f32.mxu0 0.0
    %169 = vmatmul.mubr.f32.gmra.mxu0 %v84
    %v170 = vpop.f32.mrf.mxu0
    %v171 = vadd.f32 0.0, %v170
    %v172 = vpop.f32.mrf.mxu0
    %v173 = vadd.f32 0.0, %v172
    %174 = vdwg.mxu0
    %175 = vmatprep.subr.mxu0 0.0
    %176 = vmatpush1.msra.mxu0 0.0
    %177 = vmatprep.subr.mxu0 0.0
    %178 = vmatpush1.msra.mxu0 0.0
    %179 = vmatprep.subr.mxu0 0.0
    %180 = vmatpush1.msra.mxu0 0.0
    %181 = vmatprep.subr.mxu0 0.0
    %182 = vmatpush1.msra.mxu0 0.0
    %183 = vmatprep.subr.mxu0 0.0
    %184 = vmatpush1.msra.mxu0 0.0
    %185 = vmatprep.subr.mxu0 0.0
    %186 = vmatpush1.msra.mxu0 0.0
    %187 = vmatprep.subr.mxu0 0.0
    %188 = vmatpush1.msra.mxu0 0.0
    %189 = vmatprep.subr.mxu0 0.0
    %190 = vmatpush1.msra.mxu0 0.0
    %191 = vmatprep.subr.mxu0 0.0
    %192 = vmatpush1.msra.mxu0 0.0
    %193 = vmatprep.subr.mxu0 0.0
    %194 = vmatpush1.msra.mxu0 0.0
    %195 = vmatprep.subr.mxu0 0.0
    %196 = vmatpush1.msra.mxu0 0.0
    %197 = vmatprep.subr.mxu0 0.0
    %198 = vmatpush1.msra.mxu0 0.0
    %199 = vmatprep.subr.mxu0 0.0
    %200 = vmatpush1.msra.mxu0 0.0
    %201 = vmatprep.subr.mxu0 0.0
    %202 = vmatpush1.msra.mxu0 0.0
    %203 = vmatprep.subr.mxu0 %v71
    %204 = vmatpush1.msra.mxu0 %v70
    %205 = vmatprep.subr.mxu0 %v66
    %206 = vmatpush1.msra.mxu0 %v65
    %207 = vmatprep.subr.mxu0 0.0
    %208 = vmatpush2.msra.mxu0 0.0
    %209 = vmatprep.subr.mxu0 0.0
    %210 = vmatpush2.msra.mxu0 0.0
    %211 = vmatprep.subr.mxu0 0.0
    %212 = vmatpush2.msra.mxu0 0.0
    %213 = vmatprep.subr.mxu0 0.0
    %214 = vmatpush2.msra.mxu0 0.0
    %215 = vmatprep.subr.mxu0 0.0
    %216 = vmatpush2.msra.mxu0 0.0
    %217 = vmatprep.subr.mxu0 0.0
    %218 = vmatpush2.msra.mxu0 0.0
    %219 = vmatprep.subr.mxu0 0.0
    %220 = vmatpush2.msra.mxu0 0.0
    %221 = vmatprep.subr.mxu0 0.0
    %222 = vmatpush2.msra.mxu0 0.0
    %223 = vmatprep.subr.mxu0 0.0
    %224 = vmatpush2.msra.mxu0 0.0
    %225 = vmatprep.subr.mxu0 0.0
    %226 = vmatpush2.msra.mxu0 0.0
    %227 = vmatprep.subr.mxu0 0.0
    %228 = vmatpush2.msra.mxu0 0.0
    %229 = vmatprep.subr.mxu0 0.0
    %230 = vmatpush2.msra.mxu0 0.0
    %231 = vmatprep.subr.mxu0 0.0
    %232 = vmatpush2.msra.mxu0 0.0
    %233 = vmatprep.subr.mxu0 0.0
    %234 = vmatpush2.msra.mxu0 0.0
    %235 = vmatprep.subr.mxu0 0.0
    %236 = vmatpush2.msra.mxu0 0.0
    %237 = vmatprep.subr.mxu0 0.0
    %238 = vmatpush2.msra.mxu0 0.0
    %239 = vmatprep.mubr.f32.mxu0 0.0
    %240 = vmatmul.mubr.f32.gmra.mxu0 %v75
    %v241 = vpop.f32.mrf.mxu0
    %v242 = vadd.f32 0.0, %v241
    %v243 = vpop.f32.mrf.mxu0
    %v244 = vadd.f32 0.0, %v243
    %245 = vmatprep.mubr.f32.mxu0 0.0
    %246 = vmatmul.mubr.f32.gmra.mxu0 %v78
    %v247 = vpop.f32.mrf.mxu0
    %v248 = vadd.f32 0.0, %v247
    %v249 = vpop.f32.mrf.mxu0
    %v250 = vadd.f32 0.0, %v249
    %251 = vmatprep.mubr.f32.mxu0 0.0
    %252 = vmatmul.mubr.f32.gmra.mxu0 %v81
    %v253 = vpop.f32.mrf.mxu0
    %v254 = vadd.f32 0.0, %v253
    %v255 = vpop.f32.mrf.mxu0
    %v256 = vadd.f32 0.0, %v255
    %257 = vmatprep.mubr.f32.mxu0 0.0
    %258 = vmatmul.mubr.f32.gmra.mxu0 %v84
    %v259 = vpop.f32.mrf.mxu0
    %v260 = vadd.f32 0.0, %v259
    %v261 = vpop.f32.mrf.mxu0
    %v262 = vadd.f32 0.0, %v261
    %263 = vdwg.mxu0
    %264 = vmatprep.subr.mxu0 0.0
    %265 = vmatpush1.msra.mxu0 0.0
    %266 = vmatprep.subr.mxu0 0.0
    %267 = vmatpush1.msra.mxu0 0.0
    %268 = vmatprep.subr.mxu0 0.0
    %269 = vmatpush1.msra.mxu0 0.0
    %270 = vmatprep.subr.mxu0 0.0
    %271 = vmatpush1.msra.mxu0 0.0
    %272 = vmatprep.subr.mxu0 0.0
    %273 = vmatpush1.msra.mxu0 0.0
    %274 = vmatprep.subr.mxu0 0.0
    %275 = vmatpush1.msra.mxu0 0.0
    %276 = vmatprep.subr.mxu0 0.0
    %277 = vmatpush1.msra.mxu0 0.0
    %278 = vmatprep.subr.mxu0 0.0
    %279 = vmatpush1.msra.mxu0 0.0
    %280 = vmatprep.subr.mxu0 0.0
    %281 = vmatpush1.msra.mxu0 0.0
    %282 = vmatprep.subr.mxu0 0.0
    %283 = vmatpush1.msra.mxu0 0.0
    %284 = vmatprep.subr.mxu0 0.0
    %285 = vmatpush1.msra.mxu0 0.0
    %286 = vmatprep.subr.mxu0 0.0
    %287 = vmatpush1.msra.mxu0 0.0
    %288 = vmatprep.subr.mxu0 0.0
    %289 = vmatpush1.msra.mxu0 0.0
    %290 = vmatprep.subr.mxu0 0.0
    %291 = vmatpush1.msra.mxu0 0.0
    %292 = vmatprep.subr.mxu0 0.0
    %293 = vmatpush1.msra.mxu0 %v72
    %294 = vmatprep.subr.mxu0 0.0
    %295 = vmatpush1.msra.mxu0 %v67
    %296 = vmatprep.subr.mxu0 0.0
    %297 = vmatpush2.msra.mxu0 0.0
    %298 = vmatprep.subr.mxu0 0.0
    %299 = vmatpush2.msra.mxu0 0.0
    %300 = vmatprep.subr.mxu0 0.0
    %301 = vmatpush2.msra.mxu0 0.0
    %302 = vmatprep.subr.mxu0 0.0
    %303 = vmatpush2.msra.mxu0 0.0
    %304 = vmatprep.subr.mxu0 0.0
    %305 = vmatpush2.msra.mxu0 0.0
    %306 = vmatprep.subr.mxu0 0.0
    %307 = vmatpush2.msra.mxu0 0.0
    %308 = vmatprep.subr.mxu0 0.0
    %309 = vmatpush2.msra.mxu0 0.0
    %310 = vmatprep.subr.mxu0 0.0
    %311 = vmatpush2.msra.mxu0 0.0
    %312 = vmatprep.subr.mxu0 0.0
    %313 = vmatpush2.msra.mxu0 0.0
    %314 = vmatprep.subr.mxu0 0.0
    %315 = vmatpush2.msra.mxu0 0.0
    %316 = vmatprep.subr.mxu0 0.0
    %317 = vmatpush2.msra.mxu0 0.0
    %318 = vmatprep.subr.mxu0 0.0
    %319 = vmatpush2.msra.mxu0 0.0
    %320 = vmatprep.subr.mxu0 0.0
    %321 = vmatpush2.msra.mxu0 0.0
    %322 = vmatprep.subr.mxu0 0.0
    %323 = vmatpush2.msra.mxu0 0.0
    %324 = vmatprep.subr.mxu0 0.0
    %325 = vmatpush2.msra.mxu0 0.0
    %326 = vmatprep.subr.mxu0 0.0
    %327 = vmatpush2.msra.mxu0 0.0
    %328 = vmatprep.mubr.f32.mxu0 0.0
    %329 = vmatmul.mubr.f32.gmra.mxu0 %v75
    %v330 = vpop.f32.mrf.mxu0
    %v331 = vadd.f32 0.0, %v330
    %v332 = vpop.f32.mrf.mxu0
    %333 = vmatprep.mubr.f32.mxu0 0.0
    %334 = vmatmul.mubr.f32.gmra.mxu0 %v78
    %v335 = vpop.f32.mrf.mxu0
    %v336 = vadd.f32 0.0, %v335
    %v337 = vpop.f32.mrf.mxu0
    %338 = vmatprep.mubr.f32.mxu0 0.0
    %339 = vmatmul.mubr.f32.gmra.mxu0 %v81
    %v340 = vpop.f32.mrf.mxu0
    %v341 = vadd.f32 0.0, %v340
    %v342 = vpop.f32.mrf.mxu0
    %343 = vmatprep.mubr.f32.mxu0 0.0
    %344 = vmatmul.mubr.f32.gmra.mxu0 %v84
    %v345 = vpop.f32.mrf.mxu0
    %v346 = vadd.f32 0.0, %v345
    %v347 = vpop.f32.mrf.mxu0
    %348 = vdwg.mxu0
    %v349 = vpack.c.bf16 %v159, %v153
    %v350 = vpack.c.bf16 %v161, %v155
    %v351 = vpack.c.bf16 %v171, %v165
    %v352 = vpack.c.bf16 %v173, %v167
    %353 = vxpose.xlu0.b32.start [1/16] %v331, 128
    %354 = vxpose.xlu0.b32.cont [2/16] %v336, 128
    %355 = vxpose.xlu0.b32.cont [3/16] %v341, 128
    %356 = vxpose.xlu0.b32.cont [4/16] %v346, 128
    %357 = vxpose.xlu0.b32.cont [5/16] 0.0, 128
    %358 = vxpose.xlu0.b32.cont [6/16] 0.0, 128
    %359 = vxpose.xlu0.b32.cont [7/16] 0.0, 128
    %360 = vxpose.xlu0.b32.cont [8/16] 0.0, 128
    %361 = vxpose.xlu0.b32.cont [9/16] 0.0, 128
    %362 = vxpose.xlu0.b32.cont [10/16] 0.0, 128
    %363 = vxpose.xlu0.b32.cont [11/16] 0.0, 128
    %364 = vxpose.xlu0.b32.cont [12/16] 0.0, 128
    %365 = vxpose.xlu0.b32.cont [13/16] 0.0, 128
    %366 = vxpose.xlu0.b32.cont [14/16] 0.0, 128
    %367 = vxpose.xlu0.b32.cont [15/16] 0.0, 128
    %368 = vxpose.xlu0.b32.end [16/16] 0.0, 128
    %v369 = vpop.trf.xlu0
    %v370 = vpop.trf.xlu0
    %v371 = vpop.trf.xlu0
    %v372 = vpop.trf.xlu0
    %v373 = vpop.trf.xlu0
    %v374 = vpop.trf.xlu0
    %v375 = vpop.trf.xlu0
    %v376 = vpop.trf.xlu0
    %v377 = vpop.trf.xlu0
    %v378 = vpop.trf.xlu0
    %v379 = vpop.trf.xlu0
    %v380 = vpop.trf.xlu0
    %v381 = vpop.trf.xlu0
    %v382 = vpop.trf.xlu0
    %v383 = vpop.trf.xlu0
    %v384 = vpop.trf.xlu0
    %v385 = vlaneseq
    %v386 = vand.u32 %v385, 127
    %v387 = vadd.s32 %v386, 128
    %389 = vset.pattern.permute.xlu0 8
    %390 = vperm.xlu0 %389, %v331
    %v391 = vpop.permute.xlu0 %390
    %394 = vset.pattern.permute.xlu0 8
    %395 = vperm.xlu0 %394, %v336
    %v396 = vpop.permute.xlu0 %395
    %399 = vset.pattern.permute.xlu0 8
    %400 = vperm.xlu0 %399, %v341
    %v401 = vpop.permute.xlu0 %400
    %404 = vset.pattern.permute.xlu0 8
    %405 = vperm.xlu0 %404, %v346
    %v406 = vpop.permute.xlu0 %405
    %v408 = vlaneseq
    %v409 = vshrl.u32 %v408, 7
    %v410 = vsub.s32 0, %v409
    %v411 = vrot.slane %v369, %v410
    %v412 = vadd.f32 %v391, %v411
    %v413 = vadd.f32 %v396, %v411
    %v414 = vadd.f32 %v401, %v411
    %v415 = vadd.f32 %v406, %v411
    %vm416 = vcmp.ge.f32.partialorder %v412, 0.0
    %vm417 = vcmp.ge.f32.partialorder %v413, 0.0
    %vm418 = vcmp.ge.f32.partialorder %v414, 0.0
    %vm419 = vcmp.ge.f32.partialorder %v415, 0.0
    %v420 = vmul.f32 %v412, 0.2
    %v421 = vmul.f32 %v413, 0.2
    %v422 = vmul.f32 %v414, 0.2
    %v423 = vmul.f32 %v415, 0.2
    %v424 = vsel %vm416, %v412, %v420
    %v425 = vsel %vm417, %v413, %v421
    %v426 = vsel %vm418, %v414, %v422
    %v427 = vsel %vm419, %v415, %v423
    %v428 = vadd.f32 %v424, %v59
    %v429 = vadd.f32 %v425, %v60
    %v430 = vadd.f32 %v426, %v61
    %v431 = vadd.f32 %v427, %v62
    %vm432 = vcmask 261120
    %v433 = vsel %vm432, %v428, -inf
    %434 = vmax.xlane.f32.xlu0 %v433
    %v435 = vpop.xlane.xlu0 %434
    %v436 = vsel %vm432, %v429, -inf
    %437 = vmax.xlane.f32.xlu0 %v436
    %v438 = vpop.xlane.xlu0 %437
    %v439 = vsel %vm432, %v430, -inf
    %440 = vmax.xlane.f32.xlu0 %v439
    %v441 = vpop.xlane.xlu0 %440
    %v442 = vsel %vm432, %v431, -inf
    %443 = vmax.xlane.f32.xlu0 %v442
    %v444 = vpop.xlane.xlu0 %443
    %v445 = vsub.f32 %v428, %v435
    %v446 = vsub.f32 %v429, %v438
    %v447 = vsub.f32 %v430, %v441
    %v448 = vsub.f32 %v431, %v444
    %v449 = vmul.f32 %v445, 1.442695
    %v450 = vpow.pop %v449
    %v451 = vmul.f32 %v446, 1.442695
    %v452 = vpow.pop %v451
    %v453 = vmul.f32 %v447, 1.442695
    %v454 = vpow.pop %v453
    %v455 = vmul.f32 %v448, 1.442695
    %v456 = vpow.pop %v455
    %v457 = vsel %vm432, %v450, 0.0
    %458 = vadd.xlane.f32.xlu0 %v457
    %v459 = vpop.xlane.xlu0 %458
    %v460 = vsel %vm432, %v452, 0.0
    %461 = vadd.xlane.f32.xlu0 %v460
    %v462 = vpop.xlane.xlu0 %461
    %v463 = vsel %vm432, %v454, 0.0
    %464 = vadd.xlane.f32.xlu0 %v463
    %v465 = vpop.xlane.xlu0 %464
    %v466 = vsel %vm432, %v456, 0.0
    %467 = vadd.xlane.f32.xlu0 %v466
    %v468 = vpop.xlane.xlu0 %467
    %v469 = vrcp.pop %v459
    %v470 = vrcp.pop %v462
    %v471 = vrcp.pop %v465
    %v472 = vrcp.pop %v468
    %v473 = vmul.f32 %v450, %v469
    %v474 = vmul.f32 %v452, %v470
    %v475 = vmul.f32 %v454, %v471
    %v476 = vmul.f32 %v456, %v472
    %v477 = vpack.c.bf16 %v474, %v473
    %v478 = vpack.c.bf16 %v476, %v475
    %v481 = vunpack.c.l.b16 %v477
    %v482 = vunpack.c.h.b16 %v477
    %v483 = vunpack.c.l.b16 %v478
    %v484 = vunpack.c.h.b16 %v478
    %v485 = vpack.c.b16 %v481, %v481
    %v486 = vpack.c.b16 %v482, %v482
    %v487 = vpack.c.b16 %v483, %v483
    %v488 = vpack.c.b16 %v484, %v484
    %vm493 = vcmask 257024
    %494 = vst.msk [vmem:[#allocation2] sm:$0xf] %vm493, %v485
    %495 = vst.msk [vmem:[#allocation2 + $0x8] sm:$0xf] %vm493, %v486
    %496 = vst.msk [vmem:[#allocation2 + $0x10] sm:$0xf] %vm493, %v487
    %497 = vst.msk [vmem:[#allocation2 + $0x18] sm:$0xf] %vm493, %v488
    %vm498 = vcmp.ge.s32.totalorder %v386, 0
    %vm499 = vcmp.ge.s32.totalorder %v387, 0
    %vm500 = vcmp.lt.s32.totalorder %v386, 32
    %vm501 = vcmp.lt.s32.totalorder %v387, 32
    %vm502 = vmand %vm498, %vm500
    %vm503 = vmand %vm499, %vm501
    %vm504 = vmpackc.low %vm503, %vm502
    %v505 = vsel %vm504, 65537, 0
    %v506 = vlaneseq
    %v507 = vshrl.u32 %v506, 7
    %v508 = vsub.s32 0, %v507
    %v509 = vrot.slane %v505, %v508
    %v510 = vlaneseq
    %v511 = vshrl.u32 %v510, 7
    %v512 = vsub.s32 4, %v511
    %v513 = vrot.slane %v505, %v512
    %vm514 = vcmp.ne.s16.totalorder %v509, 0
    %vm515 = vcmp.ne.s16.totalorder %v513, 0
    %v516 = vsel %vm514, %v349, 0
    %v517 = vsel %vm515, %v350, 0
    %v518 = vsel %vm514, %v351, 0
    %v519 = vsel %vm515, %v352, 0
    %v524 = vunpack.c.l.b16 %v516
    %v525 = vunpack.c.l.b16 %v517
    %v526 = vunpack.c.h.b16 %v516
    %v527 = vunpack.c.h.b16 %v517
    %v528 = vunpack.c.l.b16 %v518
    %v529 = vunpack.c.l.b16 %v519
    %v530 = vunpack.c.h.b16 %v518
    %v531 = vunpack.c.h.b16 %v519
    %v532 = vpack.c.b16 %v525, %v524
    %v533 = vpack.c.b16 %v527, %v526
    %v534 = vpack.c.b16 %v529, %v528
    %v535 = vpack.c.b16 %v531, %v530
    %540 = vst [vmem:[#allocation3] sm:$0xff] %v532
    %541 = vst [vmem:[#allocation3 + $0x8] sm:$0xff] %v533
    %542 = vst [vmem:[#allocation3 + $0x10] sm:$0xff] %v534
    %543 = vst [vmem:[#allocation3 + $0x18] sm:$0xff] %v535
    %544 = vset.pattern.permute.xlu0 9
    %545 = vperm.xlu0 %544, %v331
    %v546 = vpop.permute.xlu0 %545
    %548 = vset.pattern.permute.xlu0 9
    %549 = vperm.xlu0 %548, %v336
    %v550 = vpop.permute.xlu0 %549
    %552 = vset.pattern.permute.xlu0 9
    %553 = vperm.xlu0 %552, %v341
    %v554 = vpop.permute.xlu0 %553
    %556 = vset.pattern.permute.xlu0 9
    %557 = vperm.xlu0 %556, %v346
    %v558 = vpop.permute.xlu0 %557
    %v560 = vlaneseq
    %v561 = vshrl.u32 %v560, 7
    %v562 = vsub.s32 1, %v561
    %v563 = vrot.slane %v369, %v562
    %v564 = vadd.f32 %v546, %v563
    %v565 = vadd.f32 %v550, %v563
    %v566 = vadd.f32 %v554, %v563
    %v567 = vadd.f32 %v558, %v563
    %vm568 = vcmp.ge.f32.partialorder %v564, 0.0
    %vm569 = vcmp.ge.f32.partialorder %v565, 0.0
    %vm570 = vcmp.ge.f32.partialorder %v566, 0.0
    %vm571 = vcmp.ge.f32.partialorder %v567, 0.0
    %v572 = vmul.f32 %v564, 0.2
    %v573 = vmul.f32 %v565, 0.2
    %v574 = vmul.f32 %v566, 0.2
    %v575 = vmul.f32 %v567, 0.2
    %v576 = vsel %vm568, %v564, %v572
    %v577 = vsel %vm569, %v565, %v573
    %v578 = vsel %vm570, %v566, %v574
    %v579 = vsel %vm571, %v567, %v575
    %v580 = vadd.f32 %v576, %v59
    %v581 = vadd.f32 %v577, %v60
    %v582 = vadd.f32 %v578, %v61
    %v583 = vadd.f32 %v579, %v62
    %v584 = vsel %vm432, %v580, -inf
    %585 = vmax.xlane.f32.xlu0 %v584
    %v586 = vpop.xlane.xlu0 %585
    %v587 = vsel %vm432, %v581, -inf
    %588 = vmax.xlane.f32.xlu0 %v587
    %v589 = vpop.xlane.xlu0 %588
    %v590 = vsel %vm432, %v582, -inf
    %591 = vmax.xlane.f32.xlu0 %v590
    %v592 = vpop.xlane.xlu0 %591
    %v593 = vsel %vm432, %v583, -inf
    %594 = vmax.xlane.f32.xlu0 %v593
    %v595 = vpop.xlane.xlu0 %594
    %v596 = vsub.f32 %v580, %v586
    %v597 = vsub.f32 %v581, %v589
    %v598 = vsub.f32 %v582, %v592
    %v599 = vsub.f32 %v583, %v595
    %v600 = vmul.f32 %v596, 1.442695
    %v601 = vpow.pop %v600
    %v602 = vmul.f32 %v597, 1.442695
    %v603 = vpow.pop %v602
    %v604 = vmul.f32 %v598, 1.442695
    %v605 = vpow.pop %v604
    %v606 = vmul.f32 %v599, 1.442695
    %v607 = vpow.pop %v606
    %v608 = vsel %vm432, %v601, 0.0
    %609 = vadd.xlane.f32.xlu0 %v608
    %v610 = vpop.xlane.xlu0 %609
    %v611 = vsel %vm432, %v603, 0.0
    %612 = vadd.xlane.f32.xlu0 %v611
    %v613 = vpop.xlane.xlu0 %612
    %v614 = vsel %vm432, %v605, 0.0
    %615 = vadd.xlane.f32.xlu0 %v614
    %v616 = vpop.xlane.xlu0 %615
    %v617 = vsel %vm432, %v607, 0.0
    %618 = vadd.xlane.f32.xlu0 %v617
    %v619 = vpop.xlane.xlu0 %618
    %v620 = vrcp.pop %v610
    %v621 = vrcp.pop %v613
    %v622 = vrcp.pop %v616
    %v623 = vrcp.pop %v619
    %v624 = vmul.f32 %v601, %v620
    %v625 = vmul.f32 %v603, %v621
    %v626 = vmul.f32 %v605, %v622
    %v627 = vmul.f32 %v607, %v623
    %v628 = vpack.c.bf16 %v625, %v624
    %v629 = vpack.c.bf16 %v627, %v626
    %v632 = vunpack.c.l.b16 %v628
    %v633 = vunpack.c.h.b16 %v628
    %v634 = vunpack.c.l.b16 %v629
    %v635 = vunpack.c.h.b16 %v629
    %v636 = vpack.c.b16 %v632, %v632
    %v637 = vpack.c.b16 %v633, %v633
    %v638 = vpack.c.b16 %v634, %v634
    %v639 = vpack.c.b16 %v635, %v635
    %640 = vrot.lane.b32.xlu0 %v636, 32
    %v641 = vpop.permute.xlu0 %640
    %642 = vrot.lane.b32.xlu0 %v637, 32
    %v643 = vpop.permute.xlu0 %642
    %644 = vrot.lane.b32.xlu0 %v638, 32
    %v645 = vpop.permute.xlu0 %644
    %646 = vrot.lane.b32.xlu0 %v639, 32
    %v647 = vpop.permute.xlu0 %646
    %vm652 = vcmask 519424
    %653 = vst.msk [vmem:[#allocation2] sm:$0xf] %vm652, %v641
    %654 = vst.msk [vmem:[#allocation2 + $0x8] sm:$0xf] %vm652, %v643
    %655 = vst.msk [vmem:[#allocation2 + $0x10] sm:$0xf] %vm652, %v645
    %656 = vst.msk [vmem:[#allocation2 + $0x18] sm:$0xf] %vm652, %v647
    %vm657 = vcmp.ge.s32.totalorder %v386, 32
    %vm658 = vcmp.ge.s32.totalorder %v387, 32
    %vm659 = vcmp.lt.s32.totalorder %v386, 64
    %vm660 = vcmp.lt.s32.totalorder %v387, 64
    %vm661 = vmand %vm657, %vm659
    %vm662 = vmand %vm658, %vm660
    %vm663 = vmpackc.low %vm662, %vm661
    %v664 = vsel %vm663, 65537, 0
    %v665 = vlaneseq
    %v666 = vshrl.u32 %v665, 7
    %v667 = vsub.s32 0, %v666
    %v668 = vrot.slane %v664, %v667
    %v669 = vlaneseq
    %v670 = vshrl.u32 %v669, 7
    %v671 = vsub.s32 4, %v670
    %v672 = vrot.slane %v664, %v671
    %vm673 = vcmp.ne.s16.totalorder %v668, 0
    %vm674 = vcmp.ne.s16.totalorder %v672, 0
    %v675 = vsel %vm673, %v349, 0
    %v676 = vsel %vm674, %v350, 0
    %v677 = vsel %vm673, %v351, 0
    %v678 = vsel %vm674, %v352, 0
    %v683 = vunpack.c.l.b16 %v675
    %v684 = vunpack.c.l.b16 %v676
    %v685 = vunpack.c.h.b16 %v675
    %v686 = vunpack.c.h.b16 %v676
    %v687 = vunpack.c.l.b16 %v677
    %v688 = vunpack.c.l.b16 %v678
    %v689 = vunpack.c.h.b16 %v677
    %v690 = vunpack.c.h.b16 %v678
    %v691 = vpack.c.b16 %v684, %v683
    %v692 = vpack.c.b16 %v686, %v685
    %v693 = vpack.c.b16 %v688, %v687
    %v694 = vpack.c.b16 %v690, %v689
    %699 = vst [vmem:[#allocation3 + $0x20] sm:$0xff] %v691
    %700 = vst [vmem:[#allocation3 + $0x28] sm:$0xff] %v692
    %701 = vst [vmem:[#allocation3 + $0x30] sm:$0xff] %v693
    %702 = vst [vmem:[#allocation3 + $0x38] sm:$0xff] %v694
    %703 = vset.pattern.permute.xlu0 10
    %704 = vperm.xlu0 %703, %v331
    %v705 = vpop.permute.xlu0 %704
    %707 = vset.pattern.permute.xlu0 10
    %708 = vperm.xlu0 %707, %v336
    %v709 = vpop.permute.xlu0 %708
    %711 = vset.pattern.permute.xlu0 10
    %712 = vperm.xlu0 %711, %v341
    %v713 = vpop.permute.xlu0 %712
    %715 = vset.pattern.permute.xlu0 10
    %716 = vperm.xlu0 %715, %v346
    %v717 = vpop.permute.xlu0 %716
    %v719 = vlaneseq
    %v720 = vshrl.u32 %v719, 7
    %v721 = vsub.s32 2, %v720
    %v722 = vrot.slane %v369, %v721
    %v723 = vadd.f32 %v705, %v722
    %v724 = vadd.f32 %v709, %v722
    %v725 = vadd.f32 %v713, %v722
    %v726 = vadd.f32 %v717, %v722
    %vm727 = vcmp.ge.f32.partialorder %v723, 0.0
    %vm728 = vcmp.ge.f32.partialorder %v724, 0.0
    %vm729 = vcmp.ge.f32.partialorder %v725, 0.0
    %vm730 = vcmp.ge.f32.partialorder %v726, 0.0
    %v731 = vmul.f32 %v723, 0.2
    %v732 = vmul.f32 %v724, 0.2
    %v733 = vmul.f32 %v725, 0.2
    %v734 = vmul.f32 %v726, 0.2
    %v735 = vsel %vm727, %v723, %v731
    %v736 = vsel %vm728, %v724, %v732
    %v737 = vsel %vm729, %v725, %v733
    %v738 = vsel %vm730, %v726, %v734
    %v739 = vadd.f32 %v735, %v59
    %v740 = vadd.f32 %v736, %v60
    %v741 = vadd.f32 %v737, %v61
    %v742 = vadd.f32 %v738, %v62
    %v743 = vsel %vm432, %v739, -inf
    %744 = vmax.xlane.f32.xlu0 %v743
    %v745 = vpop.xlane.xlu0 %744
    %v746 = vsel %vm432, %v740, -inf
    %747 = vmax.xlane.f32.xlu0 %v746
    %v748 = vpop.xlane.xlu0 %747
    %v749 = vsel %vm432, %v741, -inf
    %750 = vmax.xlane.f32.xlu0 %v749
    %v751 = vpop.xlane.xlu0 %750
    %v752 = vsel %vm432, %v742, -inf
    %753 = vmax.xlane.f32.xlu0 %v752
    %v754 = vpop.xlane.xlu0 %753
    %v755 = vsub.f32 %v739, %v745
    %v756 = vsub.f32 %v740, %v748
    %v757 = vsub.f32 %v741, %v751
    %v758 = vsub.f32 %v742, %v754
    %v759 = vmul.f32 %v755, 1.442695
    %v760 = vpow.pop %v759
    %v761 = vmul.f32 %v756, 1.442695
    %v762 = vpow.pop %v761
    %v763 = vmul.f32 %v757, 1.442695
    %v764 = vpow.pop %v763
    %v765 = vmul.f32 %v758, 1.442695
    %v766 = vpow.pop %v765
    %v767 = vsel %vm432, %v760, 0.0
    %768 = vadd.xlane.f32.xlu0 %v767
    %v769 = vpop.xlane.xlu0 %768
    %v770 = vsel %vm432, %v762, 0.0
    %771 = vadd.xlane.f32.xlu0 %v770
    %v772 = vpop.xlane.xlu0 %771
    %v773 = vsel %vm432, %v764, 0.0
    %774 = vadd.xlane.f32.xlu0 %v773
    %v775 = vpop.xlane.xlu0 %774
    %v776 = vsel %vm432, %v766, 0.0
    %777 = vadd.xlane.f32.xlu0 %v776
    %v778 = vpop.xlane.xlu0 %777
    %v779 = vrcp.pop %v769
    %v780 = vrcp.pop %v772
    %v781 = vrcp.pop %v775
    %v782 = vrcp.pop %v778
    %v783 = vmul.f32 %v760, %v779
    %v784 = vmul.f32 %v762, %v780
    %v785 = vmul.f32 %v764, %v781
    %v786 = vmul.f32 %v766, %v782
    %v787 = vpack.c.bf16 %v784, %v783
    %v788 = vpack.c.bf16 %v786, %v785
    %v791 = vunpack.c.l.b16 %v787
    %v792 = vunpack.c.h.b16 %v787
    %v793 = vunpack.c.l.b16 %v788
    %v794 = vunpack.c.h.b16 %v788
    %v795 = vpack.c.b16 %v791, %v791
    %v796 = vpack.c.b16 %v792, %v792
    %v797 = vpack.c.b16 %v793, %v793
    %v798 = vpack.c.b16 %v794, %v794
    %799 = vrot.lane.b32.xlu0 %v795, 64
    %v800 = vpop.permute.xlu0 %799
    %801 = vrot.lane.b32.xlu0 %v796, 64
    %v802 = vpop.permute.xlu0 %801
    %803 = vrot.lane.b32.xlu0 %v797, 64
    %v804 = vpop.permute.xlu0 %803
    %805 = vrot.lane.b32.xlu0 %v798, 64
    %v806 = vpop.permute.xlu0 %805
    %vm811 = vcmask 781824
    %812 = vst.msk [vmem:[#allocation2] sm:$0xf] %vm811, %v800
    %813 = vst.msk [vmem:[#allocation2 + $0x8] sm:$0xf] %vm811, %v802
    %814 = vst.msk [vmem:[#allocation2 + $0x10] sm:$0xf] %vm811, %v804
    %815 = vst.msk [vmem:[#allocation2 + $0x18] sm:$0xf] %vm811, %v806
    %vm816 = vcmp.ge.s32.totalorder %v386, 64
    %vm817 = vcmp.ge.s32.totalorder %v387, 64
    %vm818 = vcmp.lt.s32.totalorder %v386, 96
    %vm819 = vcmp.lt.s32.totalorder %v387, 96
    %vm820 = vmand %vm816, %vm818
    %vm821 = vmand %vm817, %vm819
    %vm822 = vmpackc.low %vm821, %vm820
    %v823 = vsel %vm822, 65537, 0
    %v824 = vlaneseq
    %v825 = vshrl.u32 %v824, 7
    %v826 = vsub.s32 0, %v825
    %v827 = vrot.slane %v823, %v826
    %v828 = vlaneseq
    %v829 = vshrl.u32 %v828, 7
    %v830 = vsub.s32 4, %v829
    %v831 = vrot.slane %v823, %v830
    %vm832 = vcmp.ne.s16.totalorder %v827, 0
    %vm833 = vcmp.ne.s16.totalorder %v831, 0
    %v834 = vsel %vm832, %v349, 0
    %v835 = vsel %vm833, %v350, 0
    %v836 = vsel %vm832, %v351, 0
    %v837 = vsel %vm833, %v352, 0
    %v842 = vunpack.c.l.b16 %v834
    %v843 = vunpack.c.l.b16 %v835
    %v844 = vunpack.c.h.b16 %v834
    %v845 = vunpack.c.h.b16 %v835
    %v846 = vunpack.c.l.b16 %v836
    %v847 = vunpack.c.l.b16 %v837
    %v848 = vunpack.c.h.b16 %v836
    %v849 = vunpack.c.h.b16 %v837
    %v850 = vpack.c.b16 %v843, %v842
    %v851 = vpack.c.b16 %v845, %v844
    %v852 = vpack.c.b16 %v847, %v846
    %v853 = vpack.c.b16 %v849, %v848
    %858 = vst [vmem:[#allocation3 + $0x40] sm:$0xff] %v850
    %859 = vst [vmem:[#allocation3 + $0x48] sm:$0xff] %v851
    %860 = vst [vmem:[#allocation3 + $0x50] sm:$0xff] %v852
    %861 = vst [vmem:[#allocation3 + $0x58] sm:$0xff] %v853
    %862 = vset.pattern.permute.xlu0 11
    %863 = vperm.xlu0 %862, %v331
    %v864 = vpop.permute.xlu0 %863
    %866 = vset.pattern.permute.xlu0 11
    %867 = vperm.xlu0 %866, %v336
    %v868 = vpop.permute.xlu0 %867
    %870 = vset.pattern.permute.xlu0 11
    %871 = vperm.xlu0 %870, %v341
    %v872 = vpop.permute.xlu0 %871
    %874 = vset.pattern.permute.xlu0 11
    %875 = vperm.xlu0 %874, %v346
    %v876 = vpop.permute.xlu0 %875
    %v878 = vlaneseq
    %v879 = vshrl.u32 %v878, 7
    %v880 = vsub.s32 3, %v879
    %v881 = vrot.slane %v369, %v880
    %v882 = vadd.f32 %v864, %v881
    %v883 = vadd.f32 %v868, %v881
    %v884 = vadd.f32 %v872, %v881
    %v885 = vadd.f32 %v876, %v881
    %vm886 = vcmp.ge.f32.partialorder %v882, 0.0
    %vm887 = vcmp.ge.f32.partialorder %v883, 0.0
    %vm888 = vcmp.ge.f32.partialorder %v884, 0.0
    %vm889 = vcmp.ge.f32.partialorder %v885, 0.0
    %v890 = vmul.f32 %v882, 0.2
    %v891 = vmul.f32 %v883, 0.2
    %v892 = vmul.f32 %v884, 0.2
    %v893 = vmul.f32 %v885, 0.2
    %v894 = vsel %vm886, %v882, %v890
    %v895 = vsel %vm887, %v883, %v891
    %v896 = vsel %vm888, %v884, %v892
    %v897 = vsel %vm889, %v885, %v893
    %v898 = vadd.f32 %v894, %v59
    %v899 = vadd.f32 %v895, %v60
    %v900 = vadd.f32 %v896, %v61
    %v901 = vadd.f32 %v897, %v62
    %v902 = vsel %vm432, %v898, -inf
    %903 = vmax.xlane.f32.xlu0 %v902
    %v904 = vpop.xlane.xlu0 %903
    %v905 = vsel %vm432, %v899, -inf
    %906 = vmax.xlane.f32.xlu0 %v905
    %v907 = vpop.xlane.xlu0 %906
    %v908 = vsel %vm432, %v900, -inf
    %909 = vmax.xlane.f32.xlu0 %v908
    %v910 = vpop.xlane.xlu0 %909
    %v911 = vsel %vm432, %v901, -inf
    %912 = vmax.xlane.f32.xlu0 %v911
    %v913 = vpop.xlane.xlu0 %912
    %v914 = vsub.f32 %v898, %v904
    %v915 = vsub.f32 %v899, %v907
    %v916 = vsub.f32 %v900, %v910
    %v917 = vsub.f32 %v901, %v913
    %v918 = vmul.f32 %v914, 1.442695
    %v919 = vpow.pop %v918
    %v920 = vmul.f32 %v915, 1.442695
    %v921 = vpow.pop %v920
    %v922 = vmul.f32 %v916, 1.442695
    %v923 = vpow.pop %v922
    %v924 = vmul.f32 %v917, 1.442695
    %v925 = vpow.pop %v924
    %v926 = vsel %vm432, %v919, 0.0
    %927 = vadd.xlane.f32.xlu0 %v926
    %v928 = vpop.xlane.xlu0 %927
    %v929 = vsel %vm432, %v921, 0.0
    %930 = vadd.xlane.f32.xlu0 %v929
    %v931 = vpop.xlane.xlu0 %930
    %v932 = vsel %vm432, %v923, 0.0
    %933 = vadd.xlane.f32.xlu0 %v932
    %v934 = vpop.xlane.xlu0 %933
    %v935 = vsel %vm432, %v925, 0.0
    %936 = vadd.xlane.f32.xlu0 %v935
    %v937 = vpop.xlane.xlu0 %936
    %v938 = vrcp.pop %v928
    %v939 = vrcp.pop %v931
    %v940 = vrcp.pop %v934
    %v941 = vrcp.pop %v937
    %v942 = vmul.f32 %v919, %v938
    %v943 = vmul.f32 %v921, %v939
    %v944 = vmul.f32 %v923, %v940
    %v945 = vmul.f32 %v925, %v941
    %v946 = vpack.c.bf16 %v943, %v942
    %v947 = vpack.c.bf16 %v945, %v944
    %v950 = vunpack.c.l.b16 %v946
    %v951 = vunpack.c.h.b16 %v946
    %v952 = vunpack.c.l.b16 %v947
    %v953 = vunpack.c.h.b16 %v947
    %v954 = vpack.c.b16 %v950, %v950
    %v955 = vpack.c.b16 %v951, %v951
    %v956 = vpack.c.b16 %v952, %v952
    %v957 = vpack.c.b16 %v953, %v953
    %958 = vrot.lane.b32.xlu0 %v954, 96
    %v959 = vpop.permute.xlu0 %958
    %960 = vrot.lane.b32.xlu0 %v955, 96
    %v961 = vpop.permute.xlu0 %960
    %962 = vrot.lane.b32.xlu0 %v956, 96
    %v963 = vpop.permute.xlu0 %962
    %964 = vrot.lane.b32.xlu0 %v957, 96
    %v965 = vpop.permute.xlu0 %964
    %vm970 = vcmask 1044224
    %971 = vst.msk [vmem:[#allocation2] sm:$0xf] %vm970, %v959
    %972 = vst.msk [vmem:[#allocation2 + $0x8] sm:$0xf] %vm970, %v961
    %973 = vst.msk [vmem:[#allocation2 + $0x10] sm:$0xf] %vm970, %v963
    %974 = vst.msk [vmem:[#allocation2 + $0x18] sm:$0xf] %vm970, %v965
    %vm975 = vcmp.ge.s32.totalorder %v386, 96
    %vm976 = vcmp.ge.s32.totalorder %v387, 96
    %vm977 = vcmp.lt.s32.totalorder %v386, 128
    %vm978 = vcmp.lt.s32.totalorder %v387, 128
    %vm979 = vmand %vm975, %vm977
    %vm980 = vmand %vm976, %vm978
    %vm981 = vmpackc.low %vm980, %vm979
    %v982 = vsel %vm981, 65537, 0
    %v983 = vlaneseq
    %v984 = vshrl.u32 %v983, 7
    %v985 = vsub.s32 0, %v984
    %v986 = vrot.slane %v982, %v985
    %v987 = vlaneseq
    %v988 = vshrl.u32 %v987, 7
    %v989 = vsub.s32 4, %v988
    %v990 = vrot.slane %v982, %v989
    %vm991 = vcmp.ne.s16.totalorder %v986, 0
    %vm992 = vcmp.ne.s16.totalorder %v990, 0
    %v993 = vsel %vm991, %v349, 0
    %v994 = vsel %vm992, %v350, 0
    %v995 = vsel %vm991, %v351, 0
    %v996 = vsel %vm992, %v352, 0
    %v1001 = vunpack.c.l.b16 %v993
    %v1002 = vunpack.c.l.b16 %v994
    %v1003 = vunpack.c.h.b16 %v993
    %v1004 = vunpack.c.h.b16 %v994
    %v1005 = vunpack.c.l.b16 %v995
    %v1006 = vunpack.c.l.b16 %v996
    %v1007 = vunpack.c.h.b16 %v995
    %v1008 = vunpack.c.h.b16 %v996
    %v1009 = vpack.c.b16 %v1002, %v1001
    %v1010 = vpack.c.b16 %v1004, %v1003
    %v1011 = vpack.c.b16 %v1006, %v1005
    %v1012 = vpack.c.b16 %v1008, %v1007
    %1017 = vst [vmem:[#allocation3 + $0x60] sm:$0xff] %v1009
    %1018 = vst [vmem:[#allocation3 + $0x68] sm:$0xff] %v1010
    %1019 = vst [vmem:[#allocation3 + $0x70] sm:$0xff] %v1011
    %1020 = vst [vmem:[#allocation3 + $0x78] sm:$0xff] %v1012
    %1021 = vset.pattern.permute.xlu0 12
    %1022 = vperm.xlu0 %1021, %v331
    %v1023 = vpop.permute.xlu0 %1022
    %1025 = vset.pattern.permute.xlu0 12
    %1026 = vperm.xlu0 %1025, %v336
    %v1027 = vpop.permute.xlu0 %1026
    %1029 = vset.pattern.permute.xlu0 12
    %1030 = vperm.xlu0 %1029, %v341
    %v1031 = vpop.permute.xlu0 %1030
    %1033 = vset.pattern.permute.xlu0 12
    %1034 = vperm.xlu0 %1033, %v346
    %v1035 = vpop.permute.xlu0 %1034
    %v1037 = vlaneseq
    %v1038 = vshrl.u32 %v1037, 7
    %v1039 = vsub.s32 4, %v1038
    %v1040 = vrot.slane %v369, %v1039
    %v1041 = vadd.f32 %v1023, %v1040
    %v1042 = vadd.f32 %v1027, %v1040
    %v1043 = vadd.f32 %v1031, %v1040
    %v1044 = vadd.f32 %v1035, %v1040
    %vm1045 = vcmp.ge.f32.partialorder %v1041, 0.0
    %vm1046 = vcmp.ge.f32.partialorder %v1042, 0.0
    %vm1047 = vcmp.ge.f32.partialorder %v1043, 0.0
    %vm1048 = vcmp.ge.f32.partialorder %v1044, 0.0
    %v1049 = vmul.f32 %v1041, 0.2
    %v1050 = vmul.f32 %v1042, 0.2
    %v1051 = vmul.f32 %v1043, 0.2
    %v1052 = vmul.f32 %v1044, 0.2
    %v1053 = vsel %vm1045, %v1041, %v1049
    %v1054 = vsel %vm1046, %v1042, %v1050
    %v1055 = vsel %vm1047, %v1043, %v1051
    %v1056 = vsel %vm1048, %v1044, %v1052
    %v1057 = vadd.f32 %v1053, %v59
    %v1058 = vadd.f32 %v1054, %v60
    %v1059 = vadd.f32 %v1055, %v61
    %v1060 = vadd.f32 %v1056, %v62
    %v1061 = vsel %vm432, %v1057, -inf
    %1062 = vmax.xlane.f32.xlu0 %v1061
    %v1063 = vpop.xlane.xlu0 %1062
    %v1064 = vsel %vm432, %v1058, -inf
    %1065 = vmax.xlane.f32.xlu0 %v1064
    %v1066 = vpop.xlane.xlu0 %1065
    %v1067 = vsel %vm432, %v1059, -inf
    %1068 = vmax.xlane.f32.xlu0 %v1067
    %v1069 = vpop.xlane.xlu0 %1068
    %v1070 = vsel %vm432, %v1060, -inf
    %1071 = vmax.xlane.f32.xlu0 %v1070
    %v1072 = vpop.xlane.xlu0 %1071
    %v1073 = vsub.f32 %v1057, %v1063
    %v1074 = vsub.f32 %v1058, %v1066
    %v1075 = vsub.f32 %v1059, %v1069
    %v1076 = vsub.f32 %v1060, %v1072
    %v1077 = vmul.f32 %v1073, 1.442695
    %v1078 = vpow.pop %v1077
    %v1079 = vmul.f32 %v1074, 1.442695
    %v1080 = vpow.pop %v1079
    %v1081 = vmul.f32 %v1075, 1.442695
    %v1082 = vpow.pop %v1081
    %v1083 = vmul.f32 %v1076, 1.442695
    %v1084 = vpow.pop %v1083
    %v1085 = vsel %vm432, %v1078, 0.0
    %1086 = vadd.xlane.f32.xlu0 %v1085
    %v1087 = vpop.xlane.xlu0 %1086
    %v1088 = vsel %vm432, %v1080, 0.0
    %1089 = vadd.xlane.f32.xlu0 %v1088
    %v1090 = vpop.xlane.xlu0 %1089
    %v1091 = vsel %vm432, %v1082, 0.0
    %1092 = vadd.xlane.f32.xlu0 %v1091
    %v1093 = vpop.xlane.xlu0 %1092
    %v1094 = vsel %vm432, %v1084, 0.0
    %1095 = vadd.xlane.f32.xlu0 %v1094
    %v1096 = vpop.xlane.xlu0 %1095
    %v1097 = vrcp.pop %v1087
    %v1098 = vrcp.pop %v1090
    %v1099 = vrcp.pop %v1093
    %v1100 = vrcp.pop %v1096
    %v1101 = vmul.f32 %v1078, %v1097
    %v1102 = vmul.f32 %v1080, %v1098
    %v1103 = vmul.f32 %v1082, %v1099
    %v1104 = vmul.f32 %v1084, %v1100
    %v1105 = vpack.c.bf16 %v1102, %v1101
    %v1106 = vpack.c.bf16 %v1104, %v1103
    %v1109 = vunpack.c.l.b16 %v1105
    %v1110 = vunpack.c.h.b16 %v1105
    %v1111 = vunpack.c.l.b16 %v1106
    %v1112 = vunpack.c.h.b16 %v1106
    %v1113 = vpack.c.b16 %v1109, %v1109
    %v1114 = vpack.c.b16 %v1110, %v1110
    %v1115 = vpack.c.b16 %v1111, %v1111
    %v1116 = vpack.c.b16 %v1112, %v1112
    %1121 = vst.msk [vmem:[#allocation2 + $0x4] sm:$0xf] %vm493, %v1113
    %1122 = vst.msk [vmem:[#allocation2 + $0xc] sm:$0xf] %vm493, %v1114
    %1123 = vst.msk [vmem:[#allocation2 + $0x14] sm:$0xf] %vm493, %v1115
    %1124 = vst.msk [vmem:[#allocation2 + $0x1c] sm:$0xf] %vm493, %v1116
    %vm1125 = vcmp.ge.s32.totalorder %v386, 128
    %vm1126 = vcmp.ge.s32.totalorder %v387, 128
    %vm1127 = vcmp.lt.s32.totalorder %v386, 160
    %vm1128 = vcmp.lt.s32.totalorder %v387, 160
    %vm1129 = vmand %vm1125, %vm1127
    %vm1130 = vmand %vm1126, %vm1128
    %vm1131 = vmpackc.low %vm1130, %vm1129
    %v1132 = vsel %vm1131, 65537, 0
    %v1133 = vlaneseq
    %v1134 = vshrl.u32 %v1133, 7
    %v1135 = vsub.s32 0, %v1134
    %v1136 = vrot.slane %v1132, %v1135
    %v1137 = vlaneseq
    %v1138 = vshrl.u32 %v1137, 7
    %v1139 = vsub.s32 4, %v1138
    %v1140 = vrot.slane %v1132, %v1139
    %vm1141 = vcmp.ne.s16.totalorder %v1136, 0
    %vm1142 = vcmp.ne.s16.totalorder %v1140, 0
    %v1143 = vsel %vm1141, %v349, 0
    %v1144 = vsel %vm1142, %v350, 0
    %v1145 = vsel %vm1141, %v351, 0
    %v1146 = vsel %vm1142, %v352, 0
    %v1151 = vunpack.c.l.b16 %v1143
    %v1152 = vunpack.c.l.b16 %v1144
    %v1153 = vunpack.c.h.b16 %v1143
    %v1154 = vunpack.c.h.b16 %v1144
    %v1155 = vunpack.c.l.b16 %v1145
    %v1156 = vunpack.c.l.b16 %v1146
    %v1157 = vunpack.c.h.b16 %v1145
    %v1158 = vunpack.c.h.b16 %v1146
    %v1159 = vpack.c.b16 %v1152, %v1151
    %v1160 = vpack.c.b16 %v1154, %v1153
    %v1161 = vpack.c.b16 %v1156, %v1155
    %v1162 = vpack.c.b16 %v1158, %v1157
    %1167 = vst [vmem:[#allocation3 + $0x80] sm:$0xff] %v1159
    %1168 = vst [vmem:[#allocation3 + $0x88] sm:$0xff] %v1160
    %1169 = vst [vmem:[#allocation3 + $0x90] sm:$0xff] %v1161
    %1170 = vst [vmem:[#allocation3 + $0x98] sm:$0xff] %v1162
    %1171 = vset.pattern.permute.xlu0 13
    %1172 = vperm.xlu0 %1171, %v331
    %v1173 = vpop.permute.xlu0 %1172
    %1175 = vset.pattern.permute.xlu0 13
    %1176 = vperm.xlu0 %1175, %v336
    %v1177 = vpop.permute.xlu0 %1176
    %1179 = vset.pattern.permute.xlu0 13
    %1180 = vperm.xlu0 %1179, %v341
    %v1181 = vpop.permute.xlu0 %1180
    %1183 = vset.pattern.permute.xlu0 13
    %1184 = vperm.xlu0 %1183, %v346
    %v1185 = vpop.permute.xlu0 %1184
    %v1187 = vlaneseq
    %v1188 = vshrl.u32 %v1187, 7
    %v1189 = vsub.s32 5, %v1188
    %v1190 = vrot.slane %v369, %v1189
    %v1191 = vadd.f32 %v1173, %v1190
    %v1192 = vadd.f32 %v1177, %v1190
    %v1193 = vadd.f32 %v1181, %v1190
    %v1194 = vadd.f32 %v1185, %v1190
    %vm1195 = vcmp.ge.f32.partialorder %v1191, 0.0
    %vm1196 = vcmp.ge.f32.partialorder %v1192, 0.0
    %vm1197 = vcmp.ge.f32.partialorder %v1193, 0.0
    %vm1198 = vcmp.ge.f32.partialorder %v1194, 0.0
    %v1199 = vmul.f32 %v1191, 0.2
    %v1200 = vmul.f32 %v1192, 0.2
    %v1201 = vmul.f32 %v1193, 0.2
    %v1202 = vmul.f32 %v1194, 0.2
    %v1203 = vsel %vm1195, %v1191, %v1199
    %v1204 = vsel %vm1196, %v1192, %v1200
    %v1205 = vsel %vm1197, %v1193, %v1201
    %v1206 = vsel %vm1198, %v1194, %v1202
    %v1207 = vadd.f32 %v1203, %v59
    %v1208 = vadd.f32 %v1204, %v60
    %v1209 = vadd.f32 %v1205, %v61
    %v1210 = vadd.f32 %v1206, %v62
    %v1211 = vsel %vm432, %v1207, -inf
    %1212 = vmax.xlane.f32.xlu0 %v1211
    %v1213 = vpop.xlane.xlu0 %1212
    %v1214 = vsel %vm432, %v1208, -inf
    %1215 = vmax.xlane.f32.xlu0 %v1214
    %v1216 = vpop.xlane.xlu0 %1215
    %v1217 = vsel %vm432, %v1209, -inf
    %1218 = vmax.xlane.f32.xlu0 %v1217
    %v1219 = vpop.xlane.xlu0 %1218
    %v1220 = vsel %vm432, %v1210, -inf
    %1221 = vmax.xlane.f32.xlu0 %v1220
    %v1222 = vpop.xlane.xlu0 %1221
    %v1223 = vsub.f32 %v1207, %v1213
    %v1224 = vsub.f32 %v1208, %v1216
    %v1225 = vsub.f32 %v1209, %v1219
    %v1226 = vsub.f32 %v1210, %v1222
    %v1227 = vmul.f32 %v1223, 1.442695
    %v1228 = vpow.pop %v1227
    %v1229 = vmul.f32 %v1224, 1.442695
    %v1230 = vpow.pop %v1229
    %v1231 = vmul.f32 %v1225, 1.442695
    %v1232 = vpow.pop %v1231
    %v1233 = vmul.f32 %v1226, 1.442695
    %v1234 = vpow.pop %v1233
    %v1235 = vsel %vm432, %v1228, 0.0
    %1236 = vadd.xlane.f32.xlu0 %v1235
    %v1237 = vpop.xlane.xlu0 %1236
    %v1238 = vsel %vm432, %v1230, 0.0
    %1239 = vadd.xlane.f32.xlu0 %v1238
    %v1240 = vpop.xlane.xlu0 %1239
    %v1241 = vsel %vm432, %v1232, 0.0
    %1242 = vadd.xlane.f32.xlu0 %v1241
    %v1243 = vpop.xlane.xlu0 %1242
    %v1244 = vsel %vm432, %v1234, 0.0
    %1245 = vadd.xlane.f32.xlu0 %v1244
    %v1246 = vpop.xlane.xlu0 %1245
    %v1247 = vrcp.pop %v1237
    %v1248 = vrcp.pop %v1240
    %v1249 = vrcp.pop %v1243
    %v1250 = vrcp.pop %v1246
    %v1251 = vmul.f32 %v1228, %v1247
    %v1252 = vmul.f32 %v1230, %v1248
    %v1253 = vmul.f32 %v1232, %v1249
    %v1254 = vmul.f32 %v1234, %v1250
    %v1255 = vpack.c.bf16 %v1252, %v1251
    %v1256 = vpack.c.bf16 %v1254, %v1253
    %v1259 = vunpack.c.l.b16 %v1255
    %v1260 = vunpack.c.h.b16 %v1255
    %v1261 = vunpack.c.l.b16 %v1256
    %v1262 = vunpack.c.h.b16 %v1256
    %v1263 = vpack.c.b16 %v1259, %v1259
    %v1264 = vpack.c.b16 %v1260, %v1260
    %v1265 = vpack.c.b16 %v1261, %v1261
    %v1266 = vpack.c.b16 %v1262, %v1262
    %1267 = vrot.lane.b32.xlu0 %v1263, 32
    %v1268 = vpop.permute.xlu0 %1267
    %1269 = vrot.lane.b32.xlu0 %v1264, 32
    %v1270 = vpop.permute.xlu0 %1269
    %1271 = vrot.lane.b32.xlu0 %v1265, 32
    %v1272 = vpop.permute.xlu0 %1271
    %1273 = vrot.lane.b32.xlu0 %v1266, 32
    %v1274 = vpop.permute.xlu0 %1273
    %1279 = vst.msk [vmem:[#allocation2 + $0x4] sm:$0xf] %vm652, %v1268
    %1280 = vst.msk [vmem:[#allocation2 + $0xc] sm:$0xf] %vm652, %v1270
    %1281 = vst.msk [vmem:[#allocation2 + $0x14] sm:$0xf] %vm652, %v1272
    %1282 = vst.msk [vmem:[#allocation2 + $0x1c] sm:$0xf] %vm652, %v1274
    %vm1283 = vcmp.ge.s32.totalorder %v386, 160
    %vm1284 = vcmp.ge.s32.totalorder %v387, 160
    %vm1285 = vcmp.lt.s32.totalorder %v386, 192
    %vm1286 = vcmp.lt.s32.totalorder %v387, 192
    %vm1287 = vmand %vm1283, %vm1285
    %vm1288 = vmand %vm1284, %vm1286
    %vm1289 = vmpackc.low %vm1288, %vm1287
    %v1290 = vsel %vm1289, 65537, 0
    %v1291 = vlaneseq
    %v1292 = vshrl.u32 %v1291, 7
    %v1293 = vsub.s32 0, %v1292
    %v1294 = vrot.slane %v1290, %v1293
    %v1295 = vlaneseq
    %v1296 = vshrl.u32 %v1295, 7
    %v1297 = vsub.s32 4, %v1296
    %v1298 = vrot.slane %v1290, %v1297
    %vm1299 = vcmp.ne.s16.totalorder %v1294, 0
    %vm1300 = vcmp.ne.s16.totalorder %v1298, 0
    %v1301 = vsel %vm1299, %v349, 0
    %v1302 = vsel %vm1300, %v350, 0
    %v1303 = vsel %vm1299, %v351, 0
    %v1304 = vsel %vm1300, %v352, 0
    %v1309 = vunpack.c.l.b16 %v1301
    %v1310 = vunpack.c.l.b16 %v1302
    %v1311 = vunpack.c.h.b16 %v1301
    %v1312 = vunpack.c.h.b16 %v1302
    %v1313 = vunpack.c.l.b16 %v1303
    %v1314 = vunpack.c.l.b16 %v1304
    %v1315 = vunpack.c.h.b16 %v1303
    %v1316 = vunpack.c.h.b16 %v1304
    %v1317 = vpack.c.b16 %v1310, %v1309
    %v1318 = vpack.c.b16 %v1312, %v1311
    %v1319 = vpack.c.b16 %v1314, %v1313
    %v1320 = vpack.c.b16 %v1316, %v1315
    %1325 = vst [vmem:[#allocation3 + $0xa0] sm:$0xff] %v1317
    %1326 = vst [vmem:[#allocation3 + $0xa8] sm:$0xff] %v1318
    %1327 = vst [vmem:[#allocation3 + $0xb0] sm:$0xff] %v1319
    %1328 = vst [vmem:[#allocation3 + $0xb8] sm:$0xff] %v1320
    %1329 = vset.pattern.permute.xlu0 14
    %1330 = vperm.xlu0 %1329, %v331
    %v1331 = vpop.permute.xlu0 %1330
    %1333 = vset.pattern.permute.xlu0 14
    %1334 = vperm.xlu0 %1333, %v336
    %v1335 = vpop.permute.xlu0 %1334
    %1337 = vset.pattern.permute.xlu0 14
    %1338 = vperm.xlu0 %1337, %v341
    %v1339 = vpop.permute.xlu0 %1338
    %1341 = vset.pattern.permute.xlu0 14
    %1342 = vperm.xlu0 %1341, %v346
    %v1343 = vpop.permute.xlu0 %1342
    %v1345 = vlaneseq
    %v1346 = vshrl.u32 %v1345, 7
    %v1347 = vsub.s32 6, %v1346
    %v1348 = vrot.slane %v369, %v1347
    %v1349 = vadd.f32 %v1331, %v1348
    %v1350 = vadd.f32 %v1335, %v1348
    %v1351 = vadd.f32 %v1339, %v1348
    %v1352 = vadd.f32 %v1343, %v1348
    %vm1353 = vcmp.ge.f32.partialorder %v1349, 0.0
    %vm1354 = vcmp.ge.f32.partialorder %v1350, 0.0
    %vm1355 = vcmp.ge.f32.partialorder %v1351, 0.0
    %vm1356 = vcmp.ge.f32.partialorder %v1352, 0.0
    %v1357 = vmul.f32 %v1349, 0.2
    %v1358 = vmul.f32 %v1350, 0.2
    %v1359 = vmul.f32 %v1351, 0.2
    %v1360 = vmul.f32 %v1352, 0.2
    %v1361 = vsel %vm1353, %v1349, %v1357
    %v1362 = vsel %vm1354, %v1350, %v1358
    %v1363 = vsel %vm1355, %v1351, %v1359
    %v1364 = vsel %vm1356, %v1352, %v1360
    %v1365 = vadd.f32 %v1361, %v59
    %v1366 = vadd.f32 %v1362, %v60
    %v1367 = vadd.f32 %v1363, %v61
    %v1368 = vadd.f32 %v1364, %v62
    %v1369 = vsel %vm432, %v1365, -inf
    %1370 = vmax.xlane.f32.xlu0 %v1369
    %v1371 = vpop.xlane.xlu0 %1370
    %v1372 = vsel %vm432, %v1366, -inf
    %1373 = vmax.xlane.f32.xlu0 %v1372
    %v1374 = vpop.xlane.xlu0 %1373
    %v1375 = vsel %vm432, %v1367, -inf
    %1376 = vmax.xlane.f32.xlu0 %v1375
    %v1377 = vpop.xlane.xlu0 %1376
    %v1378 = vsel %vm432, %v1368, -inf
    %1379 = vmax.xlane.f32.xlu0 %v1378
    %v1380 = vpop.xlane.xlu0 %1379
    %v1381 = vsub.f32 %v1365, %v1371
    %v1382 = vsub.f32 %v1366, %v1374
    %v1383 = vsub.f32 %v1367, %v1377
    %v1384 = vsub.f32 %v1368, %v1380
    %v1385 = vmul.f32 %v1381, 1.442695
    %v1386 = vpow.pop %v1385
    %v1387 = vmul.f32 %v1382, 1.442695
    %v1388 = vpow.pop %v1387
    %v1389 = vmul.f32 %v1383, 1.442695
    %v1390 = vpow.pop %v1389
    %v1391 = vmul.f32 %v1384, 1.442695
    %v1392 = vpow.pop %v1391
    %v1393 = vsel %vm432, %v1386, 0.0
    %1394 = vadd.xlane.f32.xlu0 %v1393
    %v1395 = vpop.xlane.xlu0 %1394
    %v1396 = vsel %vm432, %v1388, 0.0
    %1397 = vadd.xlane.f32.xlu0 %v1396
    %v1398 = vpop.xlane.xlu0 %1397
    %v1399 = vsel %vm432, %v1390, 0.0
    %1400 = vadd.xlane.f32.xlu0 %v1399
    %v1401 = vpop.xlane.xlu0 %1400
    %v1402 = vsel %vm432, %v1392, 0.0
    %1403 = vadd.xlane.f32.xlu0 %v1402
    %v1404 = vpop.xlane.xlu0 %1403
    %v1405 = vrcp.pop %v1395
    %v1406 = vrcp.pop %v1398
    %v1407 = vrcp.pop %v1401
    %v1408 = vrcp.pop %v1404
    %v1409 = vmul.f32 %v1386, %v1405
    %v1410 = vmul.f32 %v1388, %v1406
    %v1411 = vmul.f32 %v1390, %v1407
    %v1412 = vmul.f32 %v1392, %v1408
    %v1413 = vpack.c.bf16 %v1410, %v1409
    %v1414 = vpack.c.bf16 %v1412, %v1411
    %v1417 = vunpack.c.l.b16 %v1413
    %v1418 = vunpack.c.h.b16 %v1413
    %v1419 = vunpack.c.l.b16 %v1414
    %v1420 = vunpack.c.h.b16 %v1414
    %v1421 = vpack.c.b16 %v1417, %v1417
    %v1422 = vpack.c.b16 %v1418, %v1418
    %v1423 = vpack.c.b16 %v1419, %v1419
    %v1424 = vpack.c.b16 %v1420, %v1420
    %1425 = vrot.lane.b32.xlu0 %v1421, 64
    %v1426 = vpop.permute.xlu0 %1425
    %1427 = vrot.lane.b32.xlu0 %v1422, 64
    %v1428 = vpop.permute.xlu0 %1427
    %1429 = vrot.lane.b32.xlu0 %v1423, 64
    %v1430 = vpop.permute.xlu0 %1429
    %1431 = vrot.lane.b32.xlu0 %v1424, 64
    %v1432 = vpop.permute.xlu0 %1431
    %1437 = vst.msk [vmem:[#allocation2 + $0x4] sm:$0xf] %vm811, %v1426
    %1438 = vst.msk [vmem:[#allocation2 + $0xc] sm:$0xf] %vm811, %v1428
    %1439 = vst.msk [vmem:[#allocation2 + $0x14] sm:$0xf] %vm811, %v1430
    %1440 = vst.msk [vmem:[#allocation2 + $0x1c] sm:$0xf] %vm811, %v1432
    %vm1441 = vcmp.ge.s32.totalorder %v386, 192
    %vm1442 = vcmp.ge.s32.totalorder %v387, 192
    %vm1443 = vcmp.lt.s32.totalorder %v386, 224
    %vm1444 = vcmp.lt.s32.totalorder %v387, 224
    %vm1445 = vmand %vm1441, %vm1443
    %vm1446 = vmand %vm1442, %vm1444
    %vm1447 = vmpackc.low %vm1446, %vm1445
    %v1448 = vsel %vm1447, 65537, 0
    %v1449 = vlaneseq
    %v1450 = vshrl.u32 %v1449, 7
    %v1451 = vsub.s32 0, %v1450
    %v1452 = vrot.slane %v1448, %v1451
    %v1453 = vlaneseq
    %v1454 = vshrl.u32 %v1453, 7
    %v1455 = vsub.s32 4, %v1454
    %v1456 = vrot.slane %v1448, %v1455
    %vm1457 = vcmp.ne.s16.totalorder %v1452, 0
    %vm1458 = vcmp.ne.s16.totalorder %v1456, 0
    %v1459 = vsel %vm1457, %v349, 0
    %v1460 = vsel %vm1458, %v350, 0
    %v1461 = vsel %vm1457, %v351, 0
    %v1462 = vsel %vm1458, %v352, 0
    %v1467 = vunpack.c.l.b16 %v1459
    %v1468 = vunpack.c.l.b16 %v1460
    %v1469 = vunpack.c.h.b16 %v1459
    %v1470 = vunpack.c.h.b16 %v1460
    %v1471 = vunpack.c.l.b16 %v1461
    %v1472 = vunpack.c.l.b16 %v1462
    %v1473 = vunpack.c.h.b16 %v1461
    %v1474 = vunpack.c.h.b16 %v1462
    %v1475 = vpack.c.b16 %v1468, %v1467
    %v1476 = vpack.c.b16 %v1470, %v1469
    %v1477 = vpack.c.b16 %v1472, %v1471
    %v1478 = vpack.c.b16 %v1474, %v1473
    %1483 = vst [vmem:[#allocation3 + $0xc0] sm:$0xff] %v1475
    %1484 = vst [vmem:[#allocation3 + $0xc8] sm:$0xff] %v1476
    %1485 = vst [vmem:[#allocation3 + $0xd0] sm:$0xff] %v1477
    %1486 = vst [vmem:[#allocation3 + $0xd8] sm:$0xff] %v1478
    %1487 = vset.pattern.permute.xlu0 15
    %1488 = vperm.xlu0 %1487, %v331
    %v1489 = vpop.permute.xlu0 %1488
    %1491 = vset.pattern.permute.xlu0 15
    %1492 = vperm.xlu0 %1491, %v336
    %v1493 = vpop.permute.xlu0 %1492
    %1495 = vset.pattern.permute.xlu0 15
    %1496 = vperm.xlu0 %1495, %v341
    %v1497 = vpop.permute.xlu0 %1496
    %1499 = vset.pattern.permute.xlu0 15
    %1500 = vperm.xlu0 %1499, %v346
    %v1501 = vpop.permute.xlu0 %1500
    %v1503 = vlaneseq
    %v1504 = vshrl.u32 %v1503, 7
    %v1505 = vsub.s32 7, %v1504
    %v1506 = vrot.slane %v369, %v1505
    %v1507 = vadd.f32 %v1489, %v1506
    %v1508 = vadd.f32 %v1493, %v1506
    %v1509 = vadd.f32 %v1497, %v1506
    %v1510 = vadd.f32 %v1501, %v1506
    %vm1511 = vcmp.ge.f32.partialorder %v1507, 0.0
    %vm1512 = vcmp.ge.f32.partialorder %v1508, 0.0
    %vm1513 = vcmp.ge.f32.partialorder %v1509, 0.0
    %vm1514 = vcmp.ge.f32.partialorder %v1510, 0.0
    %v1515 = vmul.f32 %v1507, 0.2
    %v1516 = vmul.f32 %v1508, 0.2
    %v1517 = vmul.f32 %v1509, 0.2
    %v1518 = vmul.f32 %v1510, 0.2
    %v1519 = vsel %vm1511, %v1507, %v1515
    %v1520 = vsel %vm1512, %v1508, %v1516
    %v1521 = vsel %vm1513, %v1509, %v1517
    %v1522 = vsel %vm1514, %v1510, %v1518
    %v1523 = vadd.f32 %v1519, %v59
    %v1524 = vadd.f32 %v1520, %v60
    %v1525 = vadd.f32 %v1521, %v61
    %v1526 = vadd.f32 %v1522, %v62
    %v1527 = vsel %vm432, %v1523, -inf
    %1528 = vmax.xlane.f32.xlu0 %v1527
    %v1529 = vpop.xlane.xlu0 %1528
    %v1530 = vsel %vm432, %v1524, -inf
    %1531 = vmax.xlane.f32.xlu0 %v1530
    %v1532 = vpop.xlane.xlu0 %1531
    %v1533 = vsel %vm432, %v1525, -inf
    %1534 = vmax.xlane.f32.xlu0 %v1533
    %v1535 = vpop.xlane.xlu0 %1534
    %v1536 = vsel %vm432, %v1526, -inf
    %1537 = vmax.xlane.f32.xlu0 %v1536
    %v1538 = vpop.xlane.xlu0 %1537
    %v1539 = vsub.f32 %v1523, %v1529
    %v1540 = vsub.f32 %v1524, %v1532
    %v1541 = vsub.f32 %v1525, %v1535
    %v1542 = vsub.f32 %v1526, %v1538
    %v1543 = vmul.f32 %v1539, 1.442695
    %v1544 = vpow.pop %v1543
    %v1545 = vmul.f32 %v1540, 1.442695
    %v1546 = vpow.pop %v1545
    %v1547 = vmul.f32 %v1541, 1.442695
    %v1548 = vpow.pop %v1547
    %v1549 = vmul.f32 %v1542, 1.442695
    %v1550 = vpow.pop %v1549
    %v1551 = vsel %vm432, %v1544, 0.0
    %1552 = vadd.xlane.f32.xlu0 %v1551
    %v1553 = vpop.xlane.xlu0 %1552
    %v1554 = vsel %vm432, %v1546, 0.0
    %1555 = vadd.xlane.f32.xlu0 %v1554
    %v1556 = vpop.xlane.xlu0 %1555
    %v1557 = vsel %vm432, %v1548, 0.0
    %1558 = vadd.xlane.f32.xlu0 %v1557
    %v1559 = vpop.xlane.xlu0 %1558
    %v1560 = vsel %vm432, %v1550, 0.0
    %1561 = vadd.xlane.f32.xlu0 %v1560
    %v1562 = vpop.xlane.xlu0 %1561
    %v1563 = vrcp.pop %v1553
    %v1564 = vrcp.pop %v1556
    %v1565 = vrcp.pop %v1559
    %v1566 = vrcp.pop %v1562
    %v1567 = vmul.f32 %v1544, %v1563
    %v1568 = vmul.f32 %v1546, %v1564
    %v1569 = vmul.f32 %v1548, %v1565
    %v1570 = vmul.f32 %v1550, %v1566
    %v1571 = vpack.c.bf16 %v1568, %v1567
    %v1572 = vpack.c.bf16 %v1570, %v1569
    %v1575 = vunpack.c.l.b16 %v1571
    %v1576 = vunpack.c.h.b16 %v1571
    %v1577 = vunpack.c.l.b16 %v1572
    %v1578 = vunpack.c.h.b16 %v1572
    %v1579 = vpack.c.b16 %v1575, %v1575
    %v1580 = vpack.c.b16 %v1576, %v1576
    %v1581 = vpack.c.b16 %v1577, %v1577
    %v1582 = vpack.c.b16 %v1578, %v1578
    %1583 = vrot.lane.b32.xlu0 %v1579, 96
    %v1584 = vpop.permute.xlu0 %1583
    %1585 = vrot.lane.b32.xlu0 %v1580, 96
    %v1586 = vpop.permute.xlu0 %1585
    %1587 = vrot.lane.b32.xlu0 %v1581, 96
    %v1588 = vpop.permute.xlu0 %1587
    %1589 = vrot.lane.b32.xlu0 %v1582, 96
    %v1590 = vpop.permute.xlu0 %1589
    %1595 = vst.msk [vmem:[#allocation2 + $0x4] sm:$0xf] %vm970, %v1584
    %1596 = vst.msk [vmem:[#allocation2 + $0xc] sm:$0xf] %vm970, %v1586
    %1597 = vst.msk [vmem:[#allocation2 + $0x14] sm:$0xf] %vm970, %v1588
    %1598 = vst.msk [vmem:[#allocation2 + $0x1c] sm:$0xf] %vm970, %v1590
    %vm1599 = vcmp.ge.s32.totalorder %v386, 224
    %vm1600 = vcmp.ge.s32.totalorder %v387, 224
    %vm1601 = vcmp.lt.s32.totalorder %v386, 256
    %vm1602 = vcmp.lt.s32.totalorder %v387, 256
    %vm1603 = vmand %vm1599, %vm1601
    %vm1604 = vmand %vm1600, %vm1602
    %vm1605 = vmpackc.low %vm1604, %vm1603
    %v1606 = vsel %vm1605, 65537, 0
    %v1607 = vlaneseq
    %v1608 = vshrl.u32 %v1607, 7
    %v1609 = vsub.s32 0, %v1608
    %v1610 = vrot.slane %v1606, %v1609
    %v1611 = vlaneseq
    %v1612 = vshrl.u32 %v1611, 7
    %v1613 = vsub.s32 4, %v1612
    %v1614 = vrot.slane %v1606, %v1613
    %vm1615 = vcmp.ne.s16.totalorder %v1610, 0
    %vm1616 = vcmp.ne.s16.totalorder %v1614, 0
    %v1617 = vsel %vm1615, %v349, 0
    %v1618 = vsel %vm1616, %v350, 0
    %v1619 = vsel %vm1615, %v351, 0
    %v1620 = vsel %vm1616, %v352, 0
    %v1625 = vunpack.c.l.b16 %v1617
    %v1626 = vunpack.c.l.b16 %v1618
    %v1627 = vunpack.c.h.b16 %v1617
    %v1628 = vunpack.c.h.b16 %v1618
    %v1629 = vunpack.c.l.b16 %v1619
    %v1630 = vunpack.c.l.b16 %v1620
    %v1631 = vunpack.c.h.b16 %v1619
    %v1632 = vunpack.c.h.b16 %v1620
    %v1633 = vpack.c.b16 %v1626, %v1625
    %v1634 = vpack.c.b16 %v1628, %v1627
    %v1635 = vpack.c.b16 %v1630, %v1629
    %v1636 = vpack.c.b16 %v1632, %v1631
    %1641 = vst [vmem:[#allocation3 + $0xe0] sm:$0xff] %v1633
    %1642 = vst [vmem:[#allocation3 + $0xe8] sm:$0xff] %v1634
    %1643 = vst [vmem:[#allocation3 + $0xf0] sm:$0xff] %v1635
    %1644 = vst [vmem:[#allocation3 + $0xf8] sm:$0xff] %v1636
    %v1645 = vld [vmem:[#allocation2] sm:$0xff]
    %v1646 = vld [vmem:[#allocation2 + $0x8] sm:$0xff]
    %v1647 = vld [vmem:[#allocation2 + $0x10] sm:$0xff]
    %v1648 = vld [vmem:[#allocation2 + $0x18] sm:$0xff]
    %v1649 = vld [vmem:[#allocation3] sm:$0xff]
    %v1650 = vld [vmem:[#allocation3 + $0x8] sm:$0xff]
    %v1651 = vld [vmem:[#allocation3 + $0x10] sm:$0xff]
    %v1652 = vld [vmem:[#allocation3 + $0x18] sm:$0xff]
    %v1653 = vld [vmem:[#allocation3 + $0x20] sm:$0xff]
    %v1654 = vld [vmem:[#allocation3 + $0x28] sm:$0xff]
    %v1655 = vld [vmem:[#allocation3 + $0x30] sm:$0xff]
    %v1656 = vld [vmem:[#allocation3 + $0x38] sm:$0xff]
    %v1657 = vld [vmem:[#allocation3 + $0x40] sm:$0xff]
    %v1658 = vld [vmem:[#allocation3 + $0x48] sm:$0xff]
    %v1659 = vld [vmem:[#allocation3 + $0x50] sm:$0xff]
    %v1660 = vld [vmem:[#allocation3 + $0x58] sm:$0xff]
    %v1661 = vld [vmem:[#allocation3 + $0x60] sm:$0xff]
    %v1662 = vld [vmem:[#allocation3 + $0x68] sm:$0xff]
    %v1663 = vld [vmem:[#allocation3 + $0x70] sm:$0xff]
    %v1664 = vld [vmem:[#allocation3 + $0x78] sm:$0xff]
    %v1665 = vld [vmem:[#allocation3 + $0x80] sm:$0xff]
    %v1666 = vld [vmem:[#allocation3 + $0x88] sm:$0xff]
    %v1667 = vld [vmem:[#allocation3 + $0x90] sm:$0xff]
    %v1668 = vld [vmem:[#allocation3 + $0x98] sm:$0xff]
    %v1669 = vld [vmem:[#allocation3 + $0xa0] sm:$0xff]
    %v1670 = vld [vmem:[#allocation3 + $0xa8] sm:$0xff]
    %v1671 = vld [vmem:[#allocation3 + $0xb0] sm:$0xff]
    %v1672 = vld [vmem:[#allocation3 + $0xb8] sm:$0xff]
    %v1673 = vld [vmem:[#allocation3 + $0xc0] sm:$0xff]
    %v1674 = vld [vmem:[#allocation3 + $0xc8] sm:$0xff]
    %v1675 = vld [vmem:[#allocation3 + $0xd0] sm:$0xff]
    %v1676 = vld [vmem:[#allocation3 + $0xd8] sm:$0xff]
    %v1677 = vld [vmem:[#allocation3 + $0xe0] sm:$0xff]
    %v1678 = vld [vmem:[#allocation3 + $0xe8] sm:$0xff]
    %v1679 = vld [vmem:[#allocation3 + $0xf0] sm:$0xff]
    %v1680 = vld [vmem:[#allocation3 + $0xf8] sm:$0xff]
    %v1685 = vunpack.c.l.b16 %v1645
    %v1686 = vunpack.c.h.b16 %v1645
    %v1687 = vunpack.c.l.b16 %v1646
    %v1688 = vunpack.c.h.b16 %v1646
    %v1689 = vunpack.c.l.b16 %v1647
    %v1690 = vunpack.c.h.b16 %v1647
    %v1691 = vunpack.c.l.b16 %v1648
    %v1692 = vunpack.c.h.b16 %v1648
    %v1693 = vpack.c.b16 %v1687, %v1685
    %v1694 = vpack.c.b16 %v1688, %v1686
    %v1695 = vpack.c.b16 %v1691, %v1689
    %v1696 = vpack.c.b16 %v1692, %v1690
    %v1733 = vunpack.c.l.b16 %v1649
    %v1734 = vunpack.c.h.b16 %v1649
    %v1735 = vunpack.c.l.b16 %v1650
    %v1736 = vunpack.c.h.b16 %v1650
    %v1737 = vunpack.c.l.b16 %v1651
    %v1738 = vunpack.c.h.b16 %v1651
    %v1739 = vunpack.c.l.b16 %v1652
    %v1740 = vunpack.c.h.b16 %v1652
    %v1741 = vunpack.c.l.b16 %v1653
    %v1742 = vunpack.c.h.b16 %v1653
    %v1743 = vunpack.c.l.b16 %v1654
    %v1744 = vunpack.c.h.b16 %v1654
    %v1745 = vunpack.c.l.b16 %v1655
    %v1746 = vunpack.c.h.b16 %v1655
    %v1747 = vunpack.c.l.b16 %v1656
    %v1748 = vunpack.c.h.b16 %v1656
    %v1749 = vunpack.c.l.b16 %v1657
    %v1750 = vunpack.c.h.b16 %v1657
    %v1751 = vunpack.c.l.b16 %v1658
    %v1752 = vunpack.c.h.b16 %v1658
    %v1753 = vunpack.c.l.b16 %v1659
    %v1754 = vunpack.c.h.b16 %v1659
    %v1755 = vunpack.c.l.b16 %v1660
    %v1756 = vunpack.c.h.b16 %v1660
    %v1757 = vunpack.c.l.b16 %v1661
    %v1758 = vunpack.c.h.b16 %v1661
    %v1759 = vunpack.c.l.b16 %v1662
    %v1760 = vunpack.c.h.b16 %v1662
    %v1761 = vunpack.c.l.b16 %v1663
    %v1762 = vunpack.c.h.b16 %v1663
    %v1763 = vunpack.c.l.b16 %v1664
    %v1764 = vunpack.c.h.b16 %v1664
    %v1765 = vunpack.c.l.b16 %v1665
    %v1766 = vunpack.c.h.b16 %v1665
    %v1767 = vunpack.c.l.b16 %v1666
    %v1768 = vunpack.c.h.b16 %v1666
    %v1769 = vunpack.c.l.b16 %v1667
    %v1770 = vunpack.c.h.b16 %v1667
    %v1771 = vunpack.c.l.b16 %v1668
    %v1772 = vunpack.c.h.b16 %v1668
    %v1773 = vunpack.c.l.b16 %v1669
    %v1774 = vunpack.c.h.b16 %v1669
    %v1775 = vunpack.c.l.b16 %v1670
    %v1776 = vunpack.c.h.b16 %v1670
    %v1777 = vunpack.c.l.b16 %v1671
    %v1778 = vunpack.c.h.b16 %v1671
    %v1779 = vunpack.c.l.b16 %v1672
    %v1780 = vunpack.c.h.b16 %v1672
    %v1781 = vunpack.c.l.b16 %v1673
    %v1782 = vunpack.c.h.b16 %v1673
    %v1783 = vunpack.c.l.b16 %v1674
    %v1784 = vunpack.c.h.b16 %v1674
    %v1785 = vunpack.c.l.b16 %v1675
    %v1786 = vunpack.c.h.b16 %v1675
    %v1787 = vunpack.c.l.b16 %v1676
    %v1788 = vunpack.c.h.b16 %v1676
    %v1789 = vunpack.c.l.b16 %v1677
    %v1790 = vunpack.c.h.b16 %v1677
    %v1791 = vunpack.c.l.b16 %v1678
    %v1792 = vunpack.c.h.b16 %v1678
    %v1793 = vunpack.c.l.b16 %v1679
    %v1794 = vunpack.c.h.b16 %v1679
    %v1795 = vunpack.c.l.b16 %v1680
    %v1796 = vunpack.c.h.b16 %v1680
    %v1797 = vpack.c.b16 %v1735, %v1733
    %v1798 = vpack.c.b16 %v1736, %v1734
    %v1799 = vpack.c.b16 %v1739, %v1737
    %v1800 = vpack.c.b16 %v1740, %v1738
    %v1801 = vpack.c.b16 %v1743, %v1741
    %v1802 = vpack.c.b16 %v1744, %v1742
    %v1803 = vpack.c.b16 %v1747, %v1745
    %v1804 = vpack.c.b16 %v1748, %v1746
    %v1805 = vpack.c.b16 %v1751, %v1749
    %v1806 = vpack.c.b16 %v1752, %v1750
    %v1807 = vpack.c.b16 %v1755, %v1753
    %v1808 = vpack.c.b16 %v1756, %v1754
    %v1809 = vpack.c.b16 %v1759, %v1757
    %v1810 = vpack.c.b16 %v1760, %v1758
    %v1811 = vpack.c.b16 %v1763, %v1761
    %v1812 = vpack.c.b16 %v1764, %v1762
    %v1813 = vpack.c.b16 %v1767, %v1765
    %v1814 = vpack.c.b16 %v1768, %v1766
    %v1815 = vpack.c.b16 %v1771, %v1769
    %v1816 = vpack.c.b16 %v1772, %v1770
    %v1817 = vpack.c.b16 %v1775, %v1773
    %v1818 = vpack.c.b16 %v1776, %v1774
    %v1819 = vpack.c.b16 %v1779, %v1777
    %v1820 = vpack.c.b16 %v1780, %v1778
    %v1821 = vpack.c.b16 %v1783, %v1781
    %v1822 = vpack.c.b16 %v1784, %v1782
    %v1823 = vpack.c.b16 %v1787, %v1785
    %v1824 = vpack.c.b16 %v1788, %v1786
    %v1825 = vpack.c.b16 %v1791, %v1789
    %v1826 = vpack.c.b16 %v1792, %v1790
    %v1827 = vpack.c.b16 %v1795, %v1793
    %v1828 = vpack.c.b16 %v1796, %v1794
    %1861 = vmatprep.subr.bf16.mxu0 %v1812
    %1862 = vmatpush1.bf16.msra.mxu0 %v1811
    %1863 = vmatprep.subr.bf16.mxu0 %v1810
    %1864 = vmatpush1.bf16.msra.mxu0 %v1809
    %1865 = vmatprep.subr.bf16.mxu0 %v1808
    %1866 = vmatpush1.bf16.msra.mxu0 %v1807
    %1867 = vmatprep.subr.bf16.mxu0 %v1806
    %1868 = vmatpush1.bf16.msra.mxu0 %v1805
    %1869 = vmatprep.subr.bf16.mxu0 %v1804
    %1870 = vmatpush1.bf16.msra.mxu0 %v1803
    %1871 = vmatprep.subr.bf16.mxu0 %v1802
    %1872 = vmatpush1.bf16.msra.mxu0 %v1801
    %1873 = vmatprep.subr.bf16.mxu0 %v1800
    %1874 = vmatpush1.bf16.msra.mxu0 %v1799
    %1875 = vmatprep.subr.bf16.mxu0 %v1798
    %1876 = vmatpush1.bf16.msra.mxu0 %v1797
    %1877 = vmatprep.subr.bf16.mxu0 %v1828
    %1878 = vmatpush2.bf16.msra.mxu0 %v1827
    %1879 = vmatprep.subr.bf16.mxu0 %v1826
    %1880 = vmatpush2.bf16.msra.mxu0 %v1825
    %1881 = vmatprep.subr.bf16.mxu0 %v1824
    %1882 = vmatpush2.bf16.msra.mxu0 %v1823
    %1883 = vmatprep.subr.bf16.mxu0 %v1822
    %1884 = vmatpush2.bf16.msra.mxu0 %v1821
    %1885 = vmatprep.subr.bf16.mxu0 %v1820
    %1886 = vmatpush2.bf16.msra.mxu0 %v1819
    %1887 = vmatprep.subr.bf16.mxu0 %v1818
    %1888 = vmatpush2.bf16.msra.mxu0 %v1817
    %1889 = vmatprep.subr.bf16.mxu0 %v1816
    %1890 = vmatpush2.bf16.msra.mxu0 %v1815
    %1891 = vmatprep.subr.bf16.mxu0 %v1814
    %1892 = vmatpush2.bf16.msra.mxu0 %v1813
    %1893 = vmatprep.mubr.bf16.mxu0 %v1694
    %1894 = vmatmul.mubr.bf16.gmra.mxu0 %v1693
    %v1895 = vpop.f32.mrf.mxu0
    %v1896 = vadd.f32 %v242, %v1895
    %v1897 = vpop.f32.mrf.mxu0
    %v1898 = vadd.f32 %v244, %v1897
    %v1899 = vpop.f32.mrf.mxu0
    %v1900 = vadd.f32 %v248, %v1899
    %v1901 = vpop.f32.mrf.mxu0
    %v1902 = vadd.f32 %v250, %v1901
    %1903 = vmatprep.mubr.bf16.mxu0 %v1696
    %1904 = vmatmul.mubr.bf16.gmra.mxu0 %v1695
    %v1905 = vpop.f32.mrf.mxu0
    %v1906 = vadd.f32 %v254, %v1905
    %v1907 = vpop.f32.mrf.mxu0
    %v1908 = vadd.f32 %v256, %v1907
    %v1909 = vpop.f32.mrf.mxu0
    %v1910 = vadd.f32 %v260, %v1909
    %v1911 = vpop.f32.mrf.mxu0
    %v1912 = vadd.f32 %v262, %v1911
    %1913 = vdwg.mxu0
    %v1914 = vld [vmem:[%s3] sm:$0x3]
    %v1916 = vlaneseq
    %v1917 = vshrl.u32 %v1916, 7
    %v1918 = vsub.s32 0, %v1917
    %v1919 = vrot.slane %v1914, %v1918
    %v1920 = vlaneseq
    %v1921 = vshrl.u32 %v1920, 7
    %v1922 = vsub.s32 1, %v1921
    %v1923 = vrot.slane %v1914, %v1922
    %v1926 = vadd.f32 %v1896, %v1919
    %v1927 = vadd.f32 %v1898, %v1923
    %v1928 = vadd.f32 %v1900, %v1919
    %v1929 = vadd.f32 %v1902, %v1923
    %v1930 = vadd.f32 %v1906, %v1919
    %v1931 = vadd.f32 %v1908, %v1923
    %v1932 = vadd.f32 %v1910, %v1919
    %v1933 = vadd.f32 %v1912, %v1923
    %v1934 = vmax.f32 %v1926, 0.0
    %v1935 = vmax.f32 %v1927, 0.0
    %v1936 = vmax.f32 %v1928, 0.0
    %v1937 = vmax.f32 %v1929, 0.0
    %v1938 = vmax.f32 %v1930, 0.0
    %v1939 = vmax.f32 %v1931, 0.0
    %v1940 = vmax.f32 %v1932, 0.0
    %v1941 = vmax.f32 %v1933, 0.0
    %v1942 = vld [vmem:[#allocation7] sm:$0xff]
    %v1943 = vld [vmem:[#allocation7 + $0x8] sm:$0xff]
    %v1944 = vld [vmem:[#allocation7 + $0x10] sm:$0xff]
    %v1945 = vld [vmem:[#allocation7 + $0x18] sm:$0xff]
    %v1946 = vld [vmem:[#allocation7 + $0x20] sm:$0xff]
    %v1947 = vld [vmem:[#allocation7 + $0x28] sm:$0xff]
    %v1948 = vld [vmem:[#allocation7 + $0x30] sm:$0xff]
    %v1949 = vld [vmem:[#allocation7 + $0x38] sm:$0xff]
    %v1950 = vld [vmem:[#allocation7 + $0x40] sm:$0xff]
    %v1951 = vld [vmem:[#allocation7 + $0x48] sm:$0xff]
    %v1952 = vld [vmem:[#allocation7 + $0x50] sm:$0xff]
    %v1953 = vld [vmem:[#allocation7 + $0x58] sm:$0xff]
    %v1954 = vld [vmem:[#allocation7 + $0x60] sm:$0xff]
    %v1955 = vld [vmem:[#allocation7 + $0x68] sm:$0xff]
    %v1956 = vld [vmem:[#allocation7 + $0x70] sm:$0xff]
    %v1957 = vld [vmem:[#allocation7 + $0x78] sm:$0xff]
    %v1958 = vld [vmem:[#allocation7 + $0x80] sm:$0xff]
    %v1959 = vld [vmem:[#allocation7 + $0x88] sm:$0xff]
    %v1960 = vld [vmem:[#allocation7 + $0x90] sm:$0xff]
    %v1961 = vld [vmem:[#allocation7 + $0x98] sm:$0xff]
    %v1962 = vld [vmem:[#allocation7 + $0xa0] sm:$0xff]
    %v1963 = vld [vmem:[#allocation7 + $0xa8] sm:$0xff]
    %v1964 = vld [vmem:[#allocation7 + $0xb0] sm:$0xff]
    %v1965 = vld [vmem:[#allocation7 + $0xb8] sm:$0xff]
    %v1966 = vld [vmem:[#allocation7 + $0xc0] sm:$0xff]
    %v1967 = vld [vmem:[#allocation7 + $0xc8] sm:$0xff]
    %v1968 = vld [vmem:[#allocation7 + $0xd0] sm:$0xff]
    %v1969 = vld [vmem:[#allocation7 + $0xd8] sm:$0xff]
    %v1970 = vld [vmem:[#allocation7 + $0xe0] sm:$0xff]
    %v1971 = vld [vmem:[#allocation7 + $0xe8] sm:$0xff]
    %v1972 = vld [vmem:[#allocation7 + $0xf0] sm:$0xff]
    %v1973 = vld [vmem:[#allocation7 + $0xf8] sm:$0xff]
    %v1974 = vld [vmem:[#allocation7 + $0x100] sm:$0xff]
    %v1975 = vld [vmem:[#allocation7 + $0x108] sm:$0xff]
    %v1976 = vld [vmem:[#allocation7 + $0x110] sm:$0xff]
    %v1977 = vld [vmem:[#allocation7 + $0x118] sm:$0xff]
    %v1978 = vld [vmem:[#allocation7 + $0x120] sm:$0xff]
    %v1979 = vld [vmem:[#allocation7 + $0x128] sm:$0xff]
    %v1980 = vld [vmem:[#allocation7 + $0x130] sm:$0xff]
    %v1981 = vld [vmem:[#allocation7 + $0x138] sm:$0xff]
    %v1982 = vld [vmem:[#allocation7 + $0x140] sm:$0xff]
    %v1983 = vld [vmem:[#allocation7 + $0x148] sm:$0xff]
    %v1984 = vld [vmem:[#allocation7 + $0x150] sm:$0xff]
    %v1985 = vld [vmem:[#allocation7 + $0x158] sm:$0xff]
    %v1986 = vld [vmem:[#allocation7 + $0x160] sm:$0xff]
    %v1987 = vld [vmem:[#allocation7 + $0x168] sm:$0xff]
    %v1988 = vld [vmem:[#allocation7 + $0x170] sm:$0xff]
    %v1989 = vld [vmem:[#allocation7 + $0x178] sm:$0xff]
    %v1990 = vld [vmem:[#allocation7 + $0x180] sm:$0xff]
    %v1991 = vld [vmem:[#allocation7 + $0x188] sm:$0xff]
    %v1992 = vld [vmem:[#allocation7 + $0x190] sm:$0xff]
    %v1993 = vld [vmem:[#allocation7 + $0x198] sm:$0xff]
    %v1994 = vld [vmem:[#allocation7 + $0x1a0] sm:$0xff]
    %v1995 = vld [vmem:[#allocation7 + $0x1a8] sm:$0xff]
    %v1996 = vld [vmem:[#allocation7 + $0x1b0] sm:$0xff]
    %v1997 = vld [vmem:[#allocation7 + $0x1b8] sm:$0xff]
    %v1998 = vld [vmem:[#allocation7 + $0x1c0] sm:$0xff]
    %v1999 = vld [vmem:[#allocation7 + $0x1c8] sm:$0xff]
    %v2000 = vld [vmem:[#allocation7 + $0x1d0] sm:$0xff]
    %v2001 = vld [vmem:[#allocation7 + $0x1d8] sm:$0xff]
    %v2002 = vld [vmem:[#allocation7 + $0x1e0] sm:$0xff]
    %v2003 = vld [vmem:[#allocation7 + $0x1e8] sm:$0xff]
    %v2004 = vld [vmem:[#allocation7 + $0x1f0] sm:$0xff]
    %v2005 = vld [vmem:[#allocation7 + $0x1f8] sm:$0xff]
    %2006 = vmatprep.subr.mxu0 %v1973
    %2007 = vmatpush1.msra.mxu0 %v1972
    %2008 = vmatprep.subr.mxu0 %v1971
    %2009 = vmatpush1.msra.mxu0 %v1970
    %2010 = vmatprep.subr.mxu0 %v1969
    %2011 = vmatpush1.msra.mxu0 %v1968
    %2012 = vmatprep.subr.mxu0 %v1967
    %2013 = vmatpush1.msra.mxu0 %v1966
    %2014 = vmatprep.subr.mxu0 %v1965
    %2015 = vmatpush1.msra.mxu0 %v1964
    %2016 = vmatprep.subr.mxu0 %v1963
    %2017 = vmatpush1.msra.mxu0 %v1962
    %2018 = vmatprep.subr.mxu0 %v1961
    %2019 = vmatpush1.msra.mxu0 %v1960
    %2020 = vmatprep.subr.mxu0 %v1959
    %2021 = vmatpush1.msra.mxu0 %v1958
    %2022 = vmatprep.subr.mxu0 %v1957
    %2023 = vmatpush1.msra.mxu0 %v1956
    %2024 = vmatprep.subr.mxu0 %v1955
    %2025 = vmatpush1.msra.mxu0 %v1954
    %2026 = vmatprep.subr.mxu0 %v1953
    %2027 = vmatpush1.msra.mxu0 %v1952
    %2028 = vmatprep.subr.mxu0 %v1951
    %2029 = vmatpush1.msra.mxu0 %v1950
    %2030 = vmatprep.subr.mxu0 %v1949
    %2031 = vmatpush1.msra.mxu0 %v1948
    %2032 = vmatprep.subr.mxu0 %v1947
    %2033 = vmatpush1.msra.mxu0 %v1946
    %2034 = vmatprep.subr.mxu0 %v1945
    %2035 = vmatpush1.msra.mxu0 %v1944
    %2036 = vmatprep.subr.mxu0 %v1943
    %2037 = vmatpush1.msra.mxu0 %v1942
    %2038 = vmatprep.subr.mxu0 %v2005
    %2039 = vmatpush2.msra.mxu0 %v2004
    %2040 = vmatprep.subr.mxu0 %v2003
    %2041 = vmatpush2.msra.mxu0 %v2002
    %2042 = vmatprep.subr.mxu0 %v2001
    %2043 = vmatpush2.msra.mxu0 %v2000
    %2044 = vmatprep.subr.mxu0 %v1999
    %2045 = vmatpush2.msra.mxu0 %v1998
    %2046 = vmatprep.subr.mxu0 %v1997
    %2047 = vmatpush2.msra.mxu0 %v1996
    %2048 = vmatprep.subr.mxu0 %v1995
    %2049 = vmatpush2.msra.mxu0 %v1994
    %2050 = vmatprep.subr.mxu0 %v1993
    %2051 = vmatpush2.msra.mxu0 %v1992
    %2052 = vmatprep.subr.mxu0 %v1991
    %2053 = vmatpush2.msra.mxu0 %v1990
    %2054 = vmatprep.subr.mxu0 %v1989
    %2055 = vmatpush2.msra.mxu0 %v1988
    %2056 = vmatprep.subr.mxu0 %v1987
    %2057 = vmatpush2.msra.mxu0 %v1986
    %2058 = vmatprep.subr.mxu0 %v1985
    %2059 = vmatpush2.msra.mxu0 %v1984
    %2060 = vmatprep.subr.mxu0 %v1983
    %2061 = vmatpush2.msra.mxu0 %v1982
    %2062 = vmatprep.subr.mxu0 %v1981
    %2063 = vmatpush2.msra.mxu0 %v1980
    %2064 = vmatprep.subr.mxu0 %v1979
    %2065 = vmatpush2.msra.mxu0 %v1978
    %2066 = vmatprep.subr.mxu0 %v1977
    %2067 = vmatpush2.msra.mxu0 %v1976
    %2068 = vmatprep.subr.mxu0 %v1975
    %2069 = vmatpush2.msra.mxu0 %v1974
    %2070 = vmatprep.mubr.f32.mxu0 %v1935
    %2071 = vmatmul.mubr.f32.gmra.mxu0 %v1934
    %v2072 = vpop.f32.mrf.mxu0
    %v2073 = vadd.f32 0.0, %v2072
    %v2074 = vpop.f32.mrf.mxu0
    %v2075 = vadd.f32 0.0, %v2074
    %2076 = vmatprep.mubr.f32.mxu0 %v1937
    %2077 = vmatmul.mubr.f32.gmra.mxu0 %v1936
    %v2078 = vpop.f32.mrf.mxu0
    %v2079 = vadd.f32 0.0, %v2078
    %v2080 = vpop.f32.mrf.mxu0
    %v2081 = vadd.f32 0.0, %v2080
    %2082 = vmatprep.mubr.f32.mxu0 %v1939
    %2083 = vmatmul.mubr.f32.gmra.mxu0 %v1938
    %v2084 = vpop.f32.mrf.mxu0
    %v2085 = vadd.f32 0.0, %v2084
    %v2086 = vpop.f32.mrf.mxu0
    %v2087 = vadd.f32 0.0, %v2086
    %2088 = vmatprep.mubr.f32.mxu0 %v1941
    %2089 = vmatmul.mubr.f32.gmra.mxu0 %v1940
    %v2090 = vpop.f32.mrf.mxu0
    %v2091 = vadd.f32 0.0, %v2090
    %v2092 = vpop.f32.mrf.mxu0
    %v2093 = vadd.f32 0.0, %v2092
    %2094 = vdwg.mxu0
    %2099 = vrot.lane.b32.xlu0 %v2073, 96
    %v2100 = vpop.permute.xlu0 %2099
    %2101 = vrot.lane.b32.xlu0 %v2079, 96
    %v2102 = vpop.permute.xlu0 %2101
    %2103 = vrot.lane.b32.xlu0 %v2085, 96
    %v2104 = vpop.permute.xlu0 %2103
    %2105 = vrot.lane.b32.xlu0 %v2091, 96
    %v2106 = vpop.permute.xlu0 %2105
    %2111 = vxpose.xlu0.b32.start [1/16] %v2100, 128
    %2112 = vxpose.xlu0.b32.cont [2/16] %v2102, 128
    %2113 = vxpose.xlu0.b32.cont [3/16] %v2104, 128
    %2114 = vxpose.xlu0.b32.cont [4/16] %v2106, 128
    %2115 = vxpose.xlu0.b32.cont [5/16] 0.0, 128
    %2116 = vxpose.xlu0.b32.cont [6/16] 0.0, 128
    %2117 = vxpose.xlu0.b32.cont [7/16] 0.0, 128
    %2118 = vxpose.xlu0.b32.cont [8/16] 0.0, 128
    %2119 = vxpose.xlu0.b32.cont [9/16] 0.0, 128
    %2120 = vxpose.xlu0.b32.cont [10/16] 0.0, 128
    %2121 = vxpose.xlu0.b32.cont [11/16] 0.0, 128
    %2122 = vxpose.xlu0.b32.cont [12/16] 0.0, 128
    %2123 = vxpose.xlu0.b32.cont [13/16] 0.0, 128
    %2124 = vxpose.xlu0.b32.cont [14/16] 0.0, 128
    %2125 = vxpose.xlu0.b32.cont [15/16] 0.0, 128
    %2126 = vxpose.xlu0.b32.end [16/16] 0.0, 128
    %v2127 = vpop.trf.xlu0
    %v2128 = vpop.trf.xlu0
    %v2129 = vpop.trf.xlu0
    %v2130 = vpop.trf.xlu0
    %v2131 = vpop.trf.xlu0
    %v2132 = vpop.trf.xlu0
    %v2133 = vpop.trf.xlu0
    %v2134 = vpop.trf.xlu0
    %v2135 = vpop.trf.xlu0
    %v2136 = vpop.trf.xlu0
    %v2137 = vpop.trf.xlu0
    %v2138 = vpop.trf.xlu0
    %v2139 = vpop.trf.xlu0
    %v2140 = vpop.trf.xlu0
    %v2141 = vpop.trf.xlu0
    %v2142 = vpop.trf.xlu0
    %2143 = vset.pattern.permute.xlu0 33
    %2144 = vperm.xlu0 %2143, %v2073
    %v2145 = vpop.permute.xlu0 %2144
    %2147 = vset.pattern.permute.xlu0 33
    %2148 = vperm.xlu0 %2147, %v2079
    %v2149 = vpop.permute.xlu0 %2148
    %2151 = vset.pattern.permute.xlu0 33
    %2152 = vperm.xlu0 %2151, %v2085
    %v2153 = vpop.permute.xlu0 %2152
    %2155 = vset.pattern.permute.xlu0 33
    %2156 = vperm.xlu0 %2155, %v2091
    %v2157 = vpop.permute.xlu0 %2156
    %v2159 = vlaneseq
    %v2160 = vshrl.u32 %v2159, 7
    %v2161 = vsub.s32 0, %v2160
    %v2162 = vrot.slane %v2127, %v2161
    %v2163 = vadd.f32 %v2145, %v2162
    %v2164 = vadd.f32 %v2149, %v2162
    %v2165 = vadd.f32 %v2153, %v2162
    %v2166 = vadd.f32 %v2157, %v2162
    %vm2167 = vcmp.ge.f32.partialorder %v2163, 0.0
    %vm2168 = vcmp.ge.f32.partialorder %v2164, 0.0
    %vm2169 = vcmp.ge.f32.partialorder %v2165, 0.0
    %vm2170 = vcmp.ge.f32.partialorder %v2166, 0.0
    %v2171 = vmul.f32 %v2163, 0.2
    %v2172 = vmul.f32 %v2164, 0.2
    %v2173 = vmul.f32 %v2165, 0.2
    %v2174 = vmul.f32 %v2166, 0.2
    %v2175 = vsel %vm2167, %v2163, %v2171
    %v2176 = vsel %vm2168, %v2164, %v2172
    %v2177 = vsel %vm2169, %v2165, %v2173
    %v2178 = vsel %vm2170, %v2166, %v2174
    %v2179 = vadd.f32 %v2175, %v59
    %v2180 = vadd.f32 %v2176, %v60
    %v2181 = vadd.f32 %v2177, %v61
    %v2182 = vadd.f32 %v2178, %v62
    %v2183 = vsel %vm432, %v2179, -inf
    %2184 = vmax.xlane.f32.xlu0 %v2183
    %v2185 = vpop.xlane.xlu0 %2184
    %v2186 = vsel %vm432, %v2180, -inf
    %2187 = vmax.xlane.f32.xlu0 %v2186
    %v2188 = vpop.xlane.xlu0 %2187
    %v2189 = vsel %vm432, %v2181, -inf
    %2190 = vmax.xlane.f32.xlu0 %v2189
    %v2191 = vpop.xlane.xlu0 %2190
    %v2192 = vsel %vm432, %v2182, -inf
    %2193 = vmax.xlane.f32.xlu0 %v2192
    %v2194 = vpop.xlane.xlu0 %2193
    %v2195 = vsub.f32 %v2179, %v2185
    %v2196 = vsub.f32 %v2180, %v2188
    %v2197 = vsub.f32 %v2181, %v2191
    %v2198 = vsub.f32 %v2182, %v2194
    %v2199 = vmul.f32 %v2195, 1.442695
    %v2200 = vpow.pop %v2199
    %v2201 = vmul.f32 %v2196, 1.442695
    %v2202 = vpow.pop %v2201
    %v2203 = vmul.f32 %v2197, 1.442695
    %v2204 = vpow.pop %v2203
    %v2205 = vmul.f32 %v2198, 1.442695
    %v2206 = vpow.pop %v2205
    %v2207 = vsel %vm432, %v2200, 0.0
    %2208 = vadd.xlane.f32.xlu0 %v2207
    %v2209 = vpop.xlane.xlu0 %2208
    %v2210 = vsel %vm432, %v2202, 0.0
    %2211 = vadd.xlane.f32.xlu0 %v2210
    %v2212 = vpop.xlane.xlu0 %2211
    %v2213 = vsel %vm432, %v2204, 0.0
    %2214 = vadd.xlane.f32.xlu0 %v2213
    %v2215 = vpop.xlane.xlu0 %2214
    %v2216 = vsel %vm432, %v2206, 0.0
    %2217 = vadd.xlane.f32.xlu0 %v2216
    %v2218 = vpop.xlane.xlu0 %2217
    %v2219 = vrcp.pop %v2209
    %v2220 = vrcp.pop %v2212
    %v2221 = vrcp.pop %v2215
    %v2222 = vrcp.pop %v2218
    %v2223 = vmul.f32 %v2200, %v2219
    %v2224 = vmul.f32 %v2202, %v2220
    %v2225 = vmul.f32 %v2204, %v2221
    %v2226 = vmul.f32 %v2206, %v2222
    %v2227 = vpack.c.bf16 %v2224, %v2223
    %v2228 = vpack.c.bf16 %v2226, %v2225
    %v2229 = vpack.c.bf16 %v2079, %v2073
    %v2230 = vpack.c.bf16 %v2091, %v2085
    %v2232 = vsel %vm432, %v2227, 0
    %v2235 = vsel %vm432, %v2228, 0
    %2237 = vmatprep.subr.bf16.mxu0 0
    %2238 = vmatpush1.bf16.msra.mxu0 0
    %2239 = vmatprep.subr.bf16.mxu0 0
    %2240 = vmatpush1.bf16.msra.mxu0 0
    %2241 = vmatprep.subr.bf16.mxu0 0
    %2242 = vmatpush1.bf16.msra.mxu0 0
    %2243 = vmatprep.subr.bf16.mxu0 0
    %2244 = vmatpush1.bf16.msra.mxu0 0
    %2245 = vmatprep.subr.bf16.mxu0 0
    %2246 = vmatpush1.bf16.msra.mxu0 0
    %2247 = vmatprep.subr.bf16.mxu0 0
    %2248 = vmatpush1.bf16.msra.mxu0 0
    %2249 = vmatprep.subr.bf16.mxu0 0
    %2250 = vmatpush1.bf16.msra.mxu0 %v2230
    %2251 = vmatprep.subr.bf16.mxu0 0
    %2252 = vmatpush1.bf16.msra.mxu0 %v2229
    %2253 = vmatprep.subr.bf16.mxu0 0
    %2254 = vmatpush2.bf16.msra.mxu0 0
    %2255 = vmatprep.subr.bf16.mxu0 0
    %2256 = vmatpush2.bf16.msra.mxu0 0
    %2257 = vmatprep.subr.bf16.mxu0 0
    %2258 = vmatpush2.bf16.msra.mxu0 0
    %2259 = vmatprep.subr.bf16.mxu0 0
    %2260 = vmatpush2.bf16.msra.mxu0 0
    %2261 = vmatprep.subr.bf16.mxu0 0
    %2262 = vmatpush2.bf16.msra.mxu0 0
    %2263 = vmatprep.subr.bf16.mxu0 0
    %2264 = vmatpush2.bf16.msra.mxu0 0
    %2265 = vmatprep.subr.bf16.mxu0 0
    %2266 = vmatpush2.bf16.msra.mxu0 0
    %2267 = vmatprep.subr.bf16.mxu0 0
    %2268 = vmatpush2.bf16.msra.mxu0 0
    %2269 = vmatprep.mubr.bf16.mxu0 0
    %2270 = vmatmul.mubr.bf16.gmra.mxu0 %v2232
    %v2271 = vpop.f32.mrf.mxu0
    %v2272 = vadd.f32 %v2075, %v2271
    %v2273 = vpop.f32.mrf.mxu0
    %v2274 = vpop.f32.mrf.mxu0
    %v2275 = vadd.f32 %v2081, %v2274
    %v2276 = vpop.f32.mrf.mxu0
    %2277 = vmatprep.mubr.bf16.mxu0 0
    %2278 = vmatmul.mubr.bf16.gmra.mxu0 %v2235
    %v2279 = vpop.f32.mrf.mxu0
    %v2280 = vadd.f32 %v2087, %v2279
    %v2281 = vpop.f32.mrf.mxu0
    %v2282 = vpop.f32.mrf.mxu0
    %v2283 = vadd.f32 %v2093, %v2282
    %v2284 = vpop.f32.mrf.mxu0
    %2285 = vdwg.mxu0
    %v2286 = vld [vmem:[%s5] sm:$0x1]
    %v2288 = vlaneseq
    %v2289 = vshrl.u32 %v2288, 7
    %v2290 = vsub.s32 0, %v2289
    %v2291 = vrot.slane %v2286, %v2290
    %v2293 = vadd.f32 %v2272, %v2291
    %v2294 = vadd.f32 %v2275, %v2291
    %v2295 = vadd.f32 %v2280, %v2291
    %v2296 = vadd.f32 %v2283, %v2291
    %2297 = vst [vmem:[#allocation9] sm:$0xff] %v2293
    %2298 = vst [vmem:[#allocation9 + $0x8] sm:$0xff] %v2294
    %2299 = vst [vmem:[#allocation9 + $0x10] sm:$0xff] %v2295
    %2300 = vst [vmem:[#allocation9 + $0x18] sm:$0xff] %v2296
    // Predicated region
    $region34: #{gat2_forward.1} parent=1 // pred_check
      _
    $region35: #{gat2_forward.1} parent=1 // pred_check_branch
      %2302 = sbr.rel (0) target = $region37
    $region36: #{gat2_forward.1} parent=1 // pred_region
      %s2304 = ssub.s32 512, 512
      %2305 = vsyncadd [#allocation6], %s2304
      %s2306 = sshll.u32 [#allocation9], 4
      %s2307 = int_to_ptr.vmem [resolvable:$true] %s2306
      %2312 = dma.vmem_to_hbm [thread:$0]  %s2307, 512, %s6, [#allocation6], 128, 128, 8
    $region37: #{gat2_forward.1} parent=1 // pred_fallthru
      _
    // Predicated region
    $region38: #{gat2_forward.1} parent=1 // pred_check
      _
    $region39: #{gat2_forward.1} parent=1 // pred_check_branch
      %2314 = sbr.rel (0) target = $region41
    $region40: #{gat2_forward.1} parent=1 // pred_region
      %2315 = dma.done [#allocation6], 512
    $region41: #{gat2_forward.1} parent=1 // pred_fallthru
      _
    %2316 = vsyncpa [#allocation5], 1
    %2317 = vsyncpa [#allocation8], 1
    %2318 = vsyncpa [#allocation6], 1

</llo_original>
